<compile_context>
chip_gen: v7x
topology: tpu7x:2x2x1
jax: 0.10.0
libtpu: 0.0.40
codegen_flags: <defaults>
</compile_context>

<pallas_src>
import functools

import jax
import jax.numpy as jnp
from jax.experimental import pallas as pl
from jax.experimental.pallas import tpu as pltpu


def _self_attn_kernel(*refs, batch, seq_len, num_heads, head_size, add_mask):
    if add_mask:
        x_ref, mask_ref, wqkv_ref, wd3_ref, bd_ref, out_ref = refs
    else:
        x_ref, wqkv_ref, wd3_ref, bd_ref, out_ref = refs
        mask_ref = None

    B, S, H, Dh = batch, seq_len, num_heads, head_size
    D = H * Dh
    BS = B * S
    G = B * H

    # Fused QKV projection: one (B*S, D) x (D, 3D) bf16 matmul, f32 accumulate.
    # The 1/sqrt(input_dim) score scale is pre-folded into the Q columns.
    qkv = jnp.dot(x_ref[...], wqkv_ref[...],
                  preferred_element_type=jnp.float32)               # (BS, 3D) f32

    # Head split for Q, K and V in one relayout per batch:
    # (S, 3D) -> (S, 3H, Dh) -> (3H, S, Dh).  B=2, static unroll.
    per_b = []
    for b in range(B):
        t = qkv[b * S:(b + 1) * S].reshape(S, 3 * H, Dh)
        per_b.append(jnp.transpose(t, (1, 0, 2)))
    qkvt = jnp.stack(per_b, axis=0).astype(jnp.bfloat16)            # (B, 3H, S, Dh)

    q = qkvt[:, 0 * H:1 * H].reshape(G, S, Dh)                      # (B*H, S, Dh)
    k = qkvt[:, 1 * H:2 * H].reshape(G, S, Dh)
    v = qkvt[:, 2 * H:3 * H].reshape(G, S, Dh)

    # QK^T with (batch*head) as a single leading dot_general batch dim;
    # contraction over the last dim of both operands (no explicit K transpose).
    s = jnp.einsum('gqd,gkd->gqk', q, k,
                   preferred_element_type=jnp.float32)              # (G, S, S) f32
    if add_mask:
        s = s + mask_ref[...]                                       # (G, 1, S) bcast

    # Numerically stable softmax, f32, exact divide (denominator is tiny).
    s = s - jnp.max(s, axis=-1, keepdims=True)
    p = jnp.exp(s)
    p = p / jnp.sum(p, axis=-1, keepdims=True)

    # Head-batched PV matmul (probabilities cast to bf16, f32 accumulation).
    ctx = jnp.einsum('gqk,gkd->gqd', p.astype(jnp.bfloat16), v,
                     preferred_element_type=jnp.float32)            # (G, S, Dh) f32
    ctx = ctx.reshape(B, H, S, Dh).astype(jnp.bfloat16)

    # Output projection with the head merge folded in (no (H,S) transpose):
    #   out[b*S+s, e] = sum_h sum_d ctx[b, h, s, d] * wd3[h, d, e] + bd[e]
    acc = jnp.zeros((BS, D), jnp.float32)
    for h in range(H):                                              # H=4, unrolled
        ctx_h = ctx[:, h].reshape(BS, Dh)                           # (BS, Dh) bf16
        acc = acc + jnp.dot(ctx_h, wd3_ref[h],
                            preferred_element_type=jnp.float32)     # (BS, D) f32
    out = (acc + bd_ref[...]).astype(out_ref.dtype)                 # (BS, D)

    # Lane-dense store: out_ref is a (B, S*D) slab (S*D = 256 >= 2x128 lanes),
    # written as S static 32-lane column windows, then DMA'd densely to HBM.
    out3 = out.reshape(B, S, D)
    for si in range(S):                                             # S=8, unrolled
        out_ref[:, si * D:(si + 1) * D] = out3[:, si, :]


def prepare_params(wq, wk, wv, wd, bd, *, num_heads, head_size):
    """One-time torch-layout -> kernel-layout conversion (NOT per forward).

    Returns:
      wqkv: (D, 3D) bf16 fused/transposed QKV weight, softmax scale folded
            into the Q columns.
      wd3:  (H, Dh, D) bf16 dense weight (transposed, split over heads) so the
            head merge folds into the output projection.
      bd2:  (1, D) f32 dense bias.
    """
    input_dim = wq.shape[1]
    all_head = num_heads * head_size
    scale = 1.0 / (input_dim ** 0.5)
    wqkv = jnp.concatenate([wq * scale, wk, wv], axis=0).T.astype(jnp.bfloat16)
    wd3 = wd.T.reshape(num_heads, head_size, all_head).astype(jnp.bfloat16)
    bd2 = bd.reshape(1, -1).astype(jnp.float32)
    return wqkv, wd3, bd2


def self_attn_like(x, mask, wqkv, wd3, bd2, *, num_heads, head_size, has_mask):
    """x: (B, S, D) f32; mask: (B, 1, 1, S); params from prepare_params()."""
    B, S, D = x.shape
    H, Dh = num_heads, head_size
    assert D == H * Dh
    assert wqkv.shape == (D, 3 * D) and wd3.shape == (H, Dh, D)

    # torch: mask is added only when has_mask and mask.dtype != scores.dtype;
    # scores dtype follows x (f32 here). Resolved statically.
    add_mask = bool(has_mask) and (mask is not None) and (mask.dtype != x.dtype)

    x2 = x.reshape(B * S, D).astype(jnp.bfloat16)     # bf16 cast outside kernel

    args = [x2]
    if add_mask:
        # (B,1,1,S) -> one (1,S) f32 row per (batch, head) group: (B*H, 1, S).
        mask_g = jnp.broadcast_to(
            mask.reshape(B, 1, 1, S).astype(jnp.float32), (B, H, 1, S)
        ).reshape(B * H, 1, S)
        args.append(mask_g)
    args += [wqkv, wd3, bd2]

    kernel = functools.partial(
        _self_attn_kernel, batch=B, seq_len=S,
        num_heads=H, head_size=Dh, add_mask=add_mask)

    vmem_spec = pl.BlockSpec(memory_space=pltpu.MemorySpace.VMEM)
    out_flat = pl.pallas_call(
        kernel,
        out_shape=jax.ShapeDtypeStruct((B, S * D), x.dtype),   # lane-dense slab
        in_specs=[vmem_spec] * len(args),
        out_specs=vmem_spec,
        compiler_params=pltpu.CompilerParams(
            # Total VMEM footprint is a few hundred KiB: far under the 64 MiB
            # per-TC ceiling on v7x. Single invocation -> no multi-buffering
            # of the constant weight blocks to audit.
            vmem_limit_bytes=32 * 1024 * 1024,
        ),
    )(*args)
    return out_flat.reshape(B, S, D)


def _reference(x, mask, wq, wk, wv, wd, bd, *, num_heads, head_size, has_mask):
    B, S, D = x.shape
    q = x @ wq.T
    k = x @ wk.T
    v = x @ wv.T

    def split(t):
        return t.reshape(B, S, num_heads, head_size).transpose(0, 2, 1, 3)

    qh, kh, vh = split(q), split(k), split(v)
    scores = jnp.einsum("bhqd,bhkd->bhqk", qh, kh) / (D ** 0.5)
    if has_mask and mask.dtype != scores.dtype:
        scores = scores + mask.astype(scores.dtype)
    attn = jax.nn.softmax(scores, axis=-1)
    ctx = jnp.einsum("bhqk,bhkd->bhqd", attn, vh)
    ctx = ctx.transpose(0, 2, 1, 3).reshape(B, S, D)
    return ctx @ wd.T + bd


if __name__ == "__main__":
    # Small shapes: batch=2, seq=8, input_dim=32, heads=4, head_size=8.
    B, S, D = 2, 8, 32
    H, Dh = 4, 8
    has_mask = True

    key = jax.random.PRNGKey(0)
    kx, km, kq, kk, kv, kd, kb = jax.random.split(key, 7)

    x = jax.random.normal(kx, (B, S, D), dtype=jnp.float32)
    # bf16 mask -> dtype differs from the f32 scores -> mask addition is taken
    # (matching the int8-SDPA test where the dtypes differ).
    mask = (jax.random.normal(km, (B, 1, 1, S), dtype=jnp.float32) * 0.5
            ).astype(jnp.bfloat16)

    bound = 1.0 / (D ** 0.5)  # PyTorch nn.Linear default init range
    wq = jax.random.uniform(kq, (D, D), jnp.float32, -bound, bound)   # (out, in)
    wk = jax.random.uniform(kk, (D, D), jnp.float32, -bound, bound)
    wv = jax.random.uniform(kv, (D, D), jnp.float32, -bound, bound)
    wd = jax.random.uniform(kd, (D, D), jnp.float32, -bound, bound)
    bd = jax.random.uniform(kb, (D,), jnp.float32, -bound, bound)

    # One-time parameter prep (fuse + transpose + scale-fold + bf16 cast).
    wqkv, wd3, bd2 = prepare_params(wq, wk, wv, wd, bd,
                                    num_heads=H, head_size=Dh)

    out = self_attn_like(x, mask, wqkv, wd3, bd2,
                         num_heads=H, head_size=Dh, has_mask=has_mask)
    out = jax.block_until_ready(out)

    ref = _reference(x, mask, wq, wk, wv, wd, bd,
                     num_heads=H, head_size=Dh, has_mask=has_mask)
    assert out.shape == (B, S, D) and out.dtype == jnp.float32
    # bf16 matmul operands => loosened tolerance vs the f32 reference.
    assert jnp.allclose(out, ref, atol=2e-2, rtol=2e-2), "mismatch vs reference"

    print("KERNEL_OK")
</pallas_src>

<mosaic_0001>
module attributes {stable_mosaic.version = 11 : i64} {
  func.func @_self_attn_kernel(%arg0: memref<16x32xbf16, #tpu.memory_space<vmem>>, %arg1: memref<8x1x8xf32, #tpu.memory_space<vmem>>, %arg2: memref<32x96xbf16, #tpu.memory_space<vmem>>, %arg3: memref<4x8x32xbf16, #tpu.memory_space<vmem>>, %arg4: memref<1x32xf32, #tpu.memory_space<vmem>>, %arg5: memref<2x256xf32, #tpu.memory_space<vmem>>) attributes {dimension_semantics = [], scalar_prefetch = 0 : i64, scratch_operands = 0 : i64, tpu.core_type = #tpu.core_type<tc>} {
    %c0 = arith.constant 0 : index
    %c0_0 = arith.constant 0 : index
    %0 = vector.load %arg0[%c0, %c0_0] : memref<16x32xbf16, #tpu.memory_space<vmem>>, vector<16x32xbf16>
    %c0_1 = arith.constant 0 : index
    %c0_2 = arith.constant 0 : index
    %1 = vector.load %arg2[%c0_1, %c0_2] : memref<32x96xbf16, #tpu.memory_space<vmem>>, vector<32x96xbf16>
    %cst = arith.constant dense<0.000000e+00> : vector<16x96xf32>
    %2 = tpu.matmul %0, %1, %cst {dimension_numbers = #tpu.dot_dimension_numbers<[1], [0], [0], [1], [0, 0, 1, 1], [], []>} : vector<16x32xbf16>, vector<32x96xbf16>, vector<16x96xf32> -> vector<16x96xf32>
    %3 = vector.extract_strided_slice %2 {offsets = [0, 0], sizes = [8, 96], strides = [1, 1]} : vector<16x96xf32> to vector<8x96xf32>
    %4 = vector.shape_cast %3 : vector<8x96xf32> to vector<8x12x8xf32>
    %5 = tpu.transpose %4, [1, 0, 2] : vector<8x12x8xf32> -> vector<12x8x8xf32>
    %6 = vector.extract_strided_slice %2 {offsets = [8, 0], sizes = [8, 96], strides = [1, 1]} : vector<16x96xf32> to vector<8x96xf32>
    %7 = vector.shape_cast %6 : vector<8x96xf32> to vector<8x12x8xf32>
    %8 = tpu.transpose %7, [1, 0, 2] : vector<8x12x8xf32> -> vector<12x8x8xf32>
    %9 = vector.shape_cast %5 : vector<12x8x8xf32> to vector<1x12x8x8xf32>
    %10 = vector.shape_cast %8 : vector<12x8x8xf32> to vector<1x12x8x8xf32>
    %11 = tpu.concatenate %9, %10 in 0 : vector<1x12x8x8xf32>, vector<1x12x8x8xf32> -> vector<2x12x8x8xf32>
    %12 = arith.truncf %11 : vector<2x12x8x8xf32> to vector<2x12x8x8xbf16>
    %13 = vector.extract_strided_slice %12 {offsets = [0, 0, 0, 0], sizes = [2, 4, 8, 8], strides = [1, 1, 1, 1]} : vector<2x12x8x8xbf16> to vector<2x4x8x8xbf16>
    %14 = vector.shape_cast %13 : vector<2x4x8x8xbf16> to vector<8x8x8xbf16>
    %15 = vector.extract_strided_slice %12 {offsets = [0, 4, 0, 0], sizes = [2, 4, 8, 8], strides = [1, 1, 1, 1]} : vector<2x12x8x8xbf16> to vector<2x4x8x8xbf16>
    %16 = vector.shape_cast %15 : vector<2x4x8x8xbf16> to vector<8x8x8xbf16>
    %17 = vector.extract_strided_slice %12 {offsets = [0, 8, 0, 0], sizes = [2, 4, 8, 8], strides = [1, 1, 1, 1]} : vector<2x12x8x8xbf16> to vector<2x4x8x8xbf16>
    %18 = vector.shape_cast %17 : vector<2x4x8x8xbf16> to vector<8x8x8xbf16>
    "tpu.trace_start"() <{level = 10 : i32, message = "gqd,gkd->gqk"}> : () -> ()
    %cst_3 = arith.constant dense<0.000000e+00> : vector<8x8x8xf32>
    %19 = tpu.matmul %14, %16, %cst_3 {dimension_numbers = #tpu.dot_dimension_numbers<[2], [2], [1], [1], [0, 0, 0, 1, 1, 1], [0], [0]>} : vector<8x8x8xbf16>, vector<8x8x8xbf16>, vector<8x8x8xf32> -> vector<8x8x8xf32>
    "tpu.trace_stop"() : () -> ()
    %c0_4 = arith.constant 0 : index
    %c0_5 = arith.constant 0 : index
    %c0_6 = arith.constant 0 : index
    %20 = vector.load %arg1[%c0_4, %c0_5, %c0_6] : memref<8x1x8xf32, #tpu.memory_space<vmem>>, vector<8x1x8xf32>
    %21 = vector.broadcast %20 : vector<8x1x8xf32> to vector<8x8x8xf32>
    %22 = arith.addf %19, %21 : vector<8x8x8xf32>
    %cst_7 = arith.constant dense<0xFF800000> : vector<8x8xf32>
    %23 = vector.multi_reduction <maximumf>, %22, %cst_7 [2] : vector<8x8x8xf32> to vector<8x8xf32>
    %24 = vector.shape_cast %23 : vector<8x8xf32> to vector<8x8x1xf32>
    %25 = vector.broadcast %24 : vector<8x8x1xf32> to vector<8x8x8xf32>
    %26 = arith.subf %22, %25 : vector<8x8x8xf32>
    %27 = math.exp %26 : vector<8x8x8xf32>
    %cst_8 = arith.constant dense<0.000000e+00> : vector<8x8xf32>
    %28 = vector.multi_reduction <add>, %27, %cst_8 [2] : vector<8x8x8xf32> to vector<8x8xf32>
    %29 = vector.shape_cast %28 : vector<8x8xf32> to vector<8x8x1xf32>
    %30 = vector.broadcast %29 : vector<8x8x1xf32> to vector<8x8x8xf32>
    %31 = arith.divf %27, %30 : vector<8x8x8xf32>
    %32 = arith.truncf %31 : vector<8x8x8xf32> to vector<8x8x8xbf16>
    "tpu.trace_start"() <{level = 10 : i32, message = "gqk,gkd->gqd"}> : () -> ()
    %cst_9 = arith.constant dense<0.000000e+00> : vector<8x8x8xf32>
    %33 = tpu.matmul %32, %18, %cst_9 {dimension_numbers = #tpu.dot_dimension_numbers<[2], [1], [1], [2], [0, 0, 0, 1, 1, 2], [0], [0]>} : vector<8x8x8xbf16>, vector<8x8x8xbf16>, vector<8x8x8xf32> -> vector<8x8x8xf32>
    "tpu.trace_stop"() : () -> ()
    %34 = vector.shape_cast %33 : vector<8x8x8xf32> to vector<2x4x8x8xf32>
    %35 = arith.truncf %34 : vector<2x4x8x8xf32> to vector<2x4x8x8xbf16>
    %cst_10 = arith.constant 0.000000e+00 : f32
    %36 = vector.broadcast %cst_10 : f32 to vector<16x32xf32>
    %37 = vector.extract_strided_slice %35 {offsets = [0, 0, 0, 0], sizes = [2, 1, 8, 8], strides = [1, 1, 1, 1]} : vector<2x4x8x8xbf16> to vector<2x1x8x8xbf16>
    %38 = vector.shape_cast %37 : vector<2x1x8x8xbf16> to vector<2x8x8xbf16>
    %39 = vector.shape_cast %38 : vector<2x8x8xbf16> to vector<16x8xbf16>
    %c0_11 = arith.constant 0 : index
    %c0_12 = arith.constant 0 : index
    %c0_13 = arith.constant 0 : index
    %40 = vector.load %arg3[%c0_11, %c0_12, %c0_13] : memref<4x8x32xbf16, #tpu.memory_space<vmem>>, vector<1x8x32xbf16>
    %41 = vector.shape_cast %40 : vector<1x8x32xbf16> to vector<8x32xbf16>
    %cst_14 = arith.constant dense<0.000000e+00> : vector<16x32xf32>
    %42 = tpu.matmul %39, %41, %cst_14 {dimension_numbers = #tpu.dot_dimension_numbers<[1], [0], [0], [1], [0, 0, 1, 1], [], []>} : vector<16x8xbf16>, vector<8x32xbf16>, vector<16x32xf32> -> vector<16x32xf32>
    %43 = arith.addf %36, %42 : vector<16x32xf32>
    %44 = vector.extract_strided_slice %35 {offsets = [0, 1, 0, 0], sizes = [2, 1, 8, 8], strides = [1, 1, 1, 1]} : vector<2x4x8x8xbf16> to vector<2x1x8x8xbf16>
    %45 = vector.shape_cast %44 : vector<2x1x8x8xbf16> to vector<2x8x8xbf16>
    %46 = vector.shape_cast %45 : vector<2x8x8xbf16> to vector<16x8xbf16>
    %c1 = arith.constant 1 : index
    %c0_15 = arith.constant 0 : index
    %c0_16 = arith.constant 0 : index
    %47 = vector.load %arg3[%c1, %c0_15, %c0_16] : memref<4x8x32xbf16, #tpu.memory_space<vmem>>, vector<1x8x32xbf16>
    %48 = vector.shape_cast %47 : vector<1x8x32xbf16> to vector<8x32xbf16>
    %cst_17 = arith.constant dense<0.000000e+00> : vector<16x32xf32>
    %49 = tpu.matmul %46, %48, %cst_17 {dimension_numbers = #tpu.dot_dimension_numbers<[1], [0], [0], [1], [0, 0, 1, 1], [], []>} : vector<16x8xbf16>, vector<8x32xbf16>, vector<16x32xf32> -> vector<16x32xf32>
    %50 = arith.addf %43, %49 : vector<16x32xf32>
    %51 = vector.extract_strided_slice %35 {offsets = [0, 2, 0, 0], sizes = [2, 1, 8, 8], strides = [1, 1, 1, 1]} : vector<2x4x8x8xbf16> to vector<2x1x8x8xbf16>
    %52 = vector.shape_cast %51 : vector<2x1x8x8xbf16> to vector<2x8x8xbf16>
    %53 = vector.shape_cast %52 : vector<2x8x8xbf16> to vector<16x8xbf16>
    %c2 = arith.constant 2 : index
    %c0_18 = arith.constant 0 : index
    %c0_19 = arith.constant 0 : index
    %54 = vector.load %arg3[%c2, %c0_18, %c0_19] : memref<4x8x32xbf16, #tpu.memory_space<vmem>>, vector<1x8x32xbf16>
    %55 = vector.shape_cast %54 : vector<1x8x32xbf16> to vector<8x32xbf16>
    %cst_20 = arith.constant dense<0.000000e+00> : vector<16x32xf32>
    %56 = tpu.matmul %53, %55, %cst_20 {dimension_numbers = #tpu.dot_dimension_numbers<[1], [0], [0], [1], [0, 0, 1, 1], [], []>} : vector<16x8xbf16>, vector<8x32xbf16>, vector<16x32xf32> -> vector<16x32xf32>
    %57 = arith.addf %50, %56 : vector<16x32xf32>
    %58 = vector.extract_strided_slice %35 {offsets = [0, 3, 0, 0], sizes = [2, 1, 8, 8], strides = [1, 1, 1, 1]} : vector<2x4x8x8xbf16> to vector<2x1x8x8xbf16>
    %59 = vector.shape_cast %58 : vector<2x1x8x8xbf16> to vector<2x8x8xbf16>
    %60 = vector.shape_cast %59 : vector<2x8x8xbf16> to vector<16x8xbf16>
    %c3 = arith.constant 3 : index
    %c0_21 = arith.constant 0 : index
    %c0_22 = arith.constant 0 : index
    %61 = vector.load %arg3[%c3, %c0_21, %c0_22] : memref<4x8x32xbf16, #tpu.memory_space<vmem>>, vector<1x8x32xbf16>
    %62 = vector.shape_cast %61 : vector<1x8x32xbf16> to vector<8x32xbf16>
    %cst_23 = arith.constant dense<0.000000e+00> : vector<16x32xf32>
    %63 = tpu.matmul %60, %62, %cst_23 {dimension_numbers = #tpu.dot_dimension_numbers<[1], [0], [0], [1], [0, 0, 1, 1], [], []>} : vector<16x8xbf16>, vector<8x32xbf16>, vector<16x32xf32> -> vector<16x32xf32>
    %64 = arith.addf %57, %63 : vector<16x32xf32>
    %c0_24 = arith.constant 0 : index
    %c0_25 = arith.constant 0 : index
    %65 = vector.load %arg4[%c0_24, %c0_25] : memref<1x32xf32, #tpu.memory_space<vmem>>, vector<1x32xf32>
    %66 = vector.broadcast %65 : vector<1x32xf32> to vector<16x32xf32>
    %67 = arith.addf %64, %66 : vector<16x32xf32>
    %68 = vector.shape_cast %67 : vector<16x32xf32> to vector<2x8x32xf32>
    %69 = vector.extract_strided_slice %68 {offsets = [0, 0, 0], sizes = [2, 1, 32], strides = [1, 1, 1]} : vector<2x8x32xf32> to vector<2x1x32xf32>
    %70 = vector.shape_cast %69 : vector<2x1x32xf32> to vector<2x32xf32>
    %c0_26 = arith.constant 0 : index
    %c0_27 = arith.constant 0 : index
    %71 = vector.load %arg5[%c0_26, %c0_27] : memref<2x256xf32, #tpu.memory_space<vmem>>, vector<2x32xf32>
    tpu.vector_store %arg5[%c0_26, %c0_27], %70 {strides = array<i32>} : memref<2x256xf32, #tpu.memory_space<vmem>>, vector<2x32xf32>,
    %72 = vector.extract_strided_slice %68 {offsets = [0, 1, 0], sizes = [2, 1, 32], strides = [1, 1, 1]} : vector<2x8x32xf32> to vector<2x1x32xf32>
    %73 = vector.shape_cast %72 : vector<2x1x32xf32> to vector<2x32xf32>
    %c0_28 = arith.constant 0 : index
    %c32 = arith.constant 32 : index
    %74 = vector.load %arg5[%c0_28, %c32] : memref<2x256xf32, #tpu.memory_space<vmem>>, vector<2x32xf32>
    tpu.vector_store %arg5[%c0_28, %c32], %73 {strides = array<i32>} : memref<2x256xf32, #tpu.memory_space<vmem>>, vector<2x32xf32>,
    %75 = vector.extract_strided_slice %68 {offsets = [0, 2, 0], sizes = [2, 1, 32], strides = [1, 1, 1]} : vector<2x8x32xf32> to vector<2x1x32xf32>
    %76 = vector.shape_cast %75 : vector<2x1x32xf32> to vector<2x32xf32>
    %c0_29 = arith.constant 0 : index
    %c64 = arith.constant 64 : index
    %77 = vector.load %arg5[%c0_29, %c64] : memref<2x256xf32, #tpu.memory_space<vmem>>, vector<2x32xf32>
    tpu.vector_store %arg5[%c0_29, %c64], %76 {strides = array<i32>} : memref<2x256xf32, #tpu.memory_space<vmem>>, vector<2x32xf32>,
    %78 = vector.extract_strided_slice %68 {offsets = [0, 3, 0], sizes = [2, 1, 32], strides = [1, 1, 1]} : vector<2x8x32xf32> to vector<2x1x32xf32>
    %79 = vector.shape_cast %78 : vector<2x1x32xf32> to vector<2x32xf32>
    %c0_30 = arith.constant 0 : index
    %c96 = arith.constant 96 : index
    %80 = vector.load %arg5[%c0_30, %c96] : memref<2x256xf32, #tpu.memory_space<vmem>>, vector<2x32xf32>
    tpu.vector_store %arg5[%c0_30, %c96], %79 {strides = array<i32>} : memref<2x256xf32, #tpu.memory_space<vmem>>, vector<2x32xf32>,
    %81 = vector.extract_strided_slice %68 {offsets = [0, 4, 0], sizes = [2, 1, 32], strides = [1, 1, 1]} : vector<2x8x32xf32> to vector<2x1x32xf32>
    %82 = vector.shape_cast %81 : vector<2x1x32xf32> to vector<2x32xf32>
    %c0_31 = arith.constant 0 : index
    %c128 = arith.constant 128 : index
    %83 = vector.load %arg5[%c0_31, %c128] : memref<2x256xf32, #tpu.memory_space<vmem>>, vector<2x32xf32>
    tpu.vector_store %arg5[%c0_31, %c128], %82 {strides = array<i32>} : memref<2x256xf32, #tpu.memory_space<vmem>>, vector<2x32xf32>,
    %84 = vector.extract_strided_slice %68 {offsets = [0, 5, 0], sizes = [2, 1, 32], strides = [1, 1, 1]} : vector<2x8x32xf32> to vector<2x1x32xf32>
    %85 = vector.shape_cast %84 : vector<2x1x32xf32> to vector<2x32xf32>
    %c0_32 = arith.constant 0 : index
    %c160 = arith.constant 160 : index
    %86 = vector.load %arg5[%c0_32, %c160] : memref<2x256xf32, #tpu.memory_space<vmem>>, vector<2x32xf32>
    tpu.vector_store %arg5[%c0_32, %c160], %85 {strides = array<i32>} : memref<2x256xf32, #tpu.memory_space<vmem>>, vector<2x32xf32>,
    %87 = vector.extract_strided_slice %68 {offsets = [0, 6, 0], sizes = [2, 1, 32], strides = [1, 1, 1]} : vector<2x8x32xf32> to vector<2x1x32xf32>
    %88 = vector.shape_cast %87 : vector<2x1x32xf32> to vector<2x32xf32>
    %c0_33 = arith.constant 0 : index
    %c192 = arith.constant 192 : index
    %89 = vector.load %arg5[%c0_33, %c192] : memref<2x256xf32, #tpu.memory_space<vmem>>, vector<2x32xf32>
    tpu.vector_store %arg5[%c0_33, %c192], %88 {strides = array<i32>} : memref<2x256xf32, #tpu.memory_space<vmem>>, vector<2x32xf32>,
    %90 = vector.extract_strided_slice %68 {offsets = [0, 7, 0], sizes = [2, 1, 32], strides = [1, 1, 1]} : vector<2x8x32xf32> to vector<2x1x32xf32>
    %91 = vector.shape_cast %90 : vector<2x1x32xf32> to vector<2x32xf32>
    %c0_34 = arith.constant 0 : index
    %c224 = arith.constant 224 : index
    %92 = vector.load %arg5[%c0_34, %c224] : memref<2x256xf32, #tpu.memory_space<vmem>>, vector<2x32xf32>
    tpu.vector_store %arg5[%c0_34, %c224], %91 {strides = array<i32>} : memref<2x256xf32, #tpu.memory_space<vmem>>, vector<2x32xf32>,
    return
  }
}

</mosaic_0001>

<llo_original>
// kernel: tpu_custom_call.1
$region0: #{tpu_custom_call.1}
  #allocation0 [shape = 'u32[]', space=smem, size = 0x4, offset = 0x4, fixed_abs, tag = 'smem constant byte address 0x4 - core index']
  #allocation1 [shape = 'u32[144,128]{1,0:T(1,128)}', space=vmem, size = 0x12000, scoped, tag = 'internal scratch']
  %s0 = inlined_call_operand.hbm [shape: bf16[16,32], index: 0, kind: input, shape index: {}]
  %s1 = inlined_call_operand.hbm [shape: f32[8,1,8], index: 1, kind: input, shape index: {}]
  %s2 = inlined_call_operand.hbm [shape: bf16[32,96], index: 2, kind: input, shape index: {}]
  %s3 = inlined_call_operand.hbm [shape: bf16[4,8,32], index: 3, kind: input, shape index: {}]
  %s4 = inlined_call_operand.vmem [shape: f32[1,32], index: 4, kind: input, shape index: {}]
  %s5 = inlined_call_operand.hbm [shape: f32[2,256], index: 5, kind: output, shape index: {}]
  %s6 = sld [smem:[#allocation0]]
  $region46: #{tpu_custom_call.1} parent=0
    _
  %s8 = ssub.s32 1, %s6
  %s9 = scalar_select 0, %s8, %s6
  $region1: #{tpu_custom_call.1} parent=0
    #allocation2 [shape = 'u8[4096]{0}', space=vmem, size = 0x1000, scoped, tag = 'input window, operand 0, single buffered']
    #allocation3 [shape = 's32[1]{0}', space=sflag, size = 0x4, scoped, tag = 'scoped memory for tpu_custom_call.1']
    #allocation4 [shape = 's32[1]{0}', space=sflag, size = 0x4, scoped, tag = 'scoped memory for tpu_custom_call.1']
    #allocation5 [shape = 'u8[4096]{0}', space=vmem, size = 0x1000, scoped, tag = 'input window, operand 1, single buffered']
    #allocation6 [shape = 's32[1]{0}', space=sflag, size = 0x4, scoped, tag = 'scoped memory for tpu_custom_call.1']
    #allocation7 [shape = 'u8[8192]{0}', space=vmem, size = 0x2000, scoped, tag = 'input window, operand 2, single buffered']
    #allocation8 [shape = 'u8[8192]{0}', space=vmem, size = 0x2000, scoped, tag = 'input window, operand 3, single buffered']
    #allocation9 [shape = 's32[1]{0}', space=sflag, size = 0x4, scoped, tag = 'scoped memory for tpu_custom_call.1']
    #allocation10 [shape = 'u8[2048]{0}', space=vmem, size = 0x800, scoped, tag = 'output window, operand 0, single buffered']
    %10 = vsyncpa [#allocation3], 0
    %11 = vsyncpa [#allocation6], 0
    %12 = vsyncpa [#allocation9], 0
    %13 = vsyncpa [#allocation4], 0
    // Predicated region
    $region2: #{tpu_custom_call.1} parent=1 // pred_check
      _
    $region3: #{tpu_custom_call.1} parent=1 // pred_check_branch
      %15 = sbr.rel (0) target = $region5
    $region4: #{tpu_custom_call.1} parent=1 // pred_region
      %s17 = ssub.s32 128, 128
      %18 = vsyncadd [#allocation3], %s17
      %s19 = sshll.u32 [#allocation2], 4
      %s20 = int_to_ptr.vmem [resolvable:$true] %s19
      %25 = dma.hbm_to_vmem [thread:$0]  %s0, 128, %s20, [#allocation3], 64, 64, 4
    $region5: #{tpu_custom_call.1} parent=1 // pred_fallthru
      _
    // Predicated region
    $region6: #{tpu_custom_call.1} parent=1 // pred_check
      _
    $region7: #{tpu_custom_call.1} parent=1 // pred_check_branch
      %27 = sbr.rel (0) target = $region9
    $region8: #{tpu_custom_call.1} parent=1 // pred_region
      %s29 = ssub.s32 128, 128
      %30 = vsyncadd [#allocation6], %s29
      %s31 = sshll.u32 [#allocation5], 4
      %s32 = int_to_ptr.vmem [resolvable:$true] %s31
      %37 = dma.hbm_to_vmem [thread:$0]  %s1, 128, %s32, [#allocation6], 16, 16, 1
    $region9: #{tpu_custom_call.1} parent=1 // pred_fallthru
      _
    // Predicated region
    $region10: #{tpu_custom_call.1} parent=1 // pred_check
      _
    $region11: #{tpu_custom_call.1} parent=1 // pred_check_branch
      %39 = sbr.rel (0) target = $region13
    $region12: #{tpu_custom_call.1} parent=1 // pred_region
      %s41 = ssub.s32 256, 256
      %42 = vsyncadd [#allocation6], %s41
      %s43 = sshll.u32 [#allocation7], 4
      %s44 = int_to_ptr.vmem [resolvable:$true] %s43
      %49 = dma.hbm_to_vmem [thread:$0]  %s2, 256, %s44, [#allocation6], 64, 64, 4
    $region13: #{tpu_custom_call.1} parent=1 // pred_fallthru
      _
    // Predicated region
    $region14: #{tpu_custom_call.1} parent=1 // pred_check
      _
    $region15: #{tpu_custom_call.1} parent=1 // pred_check_branch
      %51 = sbr.rel (0) target = $region17
    $region16: #{tpu_custom_call.1} parent=1 // pred_region
      %s53 = ssub.s32 256, 256
      %54 = vsyncadd [#allocation9], %s53
      %s55 = sshll.u32 [#allocation8], 4
      %s56 = int_to_ptr.vmem [resolvable:$true] %s55
      %61 = dma.hbm_to_vmem [thread:$0]  %s3, 256, %s56, [#allocation9], 64, 64, 4
    $region17: #{tpu_custom_call.1} parent=1 // pred_fallthru
      _
    // Predicated region
    $region18: #{tpu_custom_call.1} parent=1 // pred_check
      _
    $region19: #{tpu_custom_call.1} parent=1 // pred_check_branch
      %63 = sbr.rel (0) target = $region21
    $region20: #{tpu_custom_call.1} parent=1 // pred_region
      _
    $region21: #{tpu_custom_call.1} parent=1 // pred_fallthru
      _
    // Predicated region
    $region22: #{tpu_custom_call.1} parent=1 // pred_check
      _
    $region23: #{tpu_custom_call.1} parent=1 // pred_check_branch
      %65 = sbr.rel (0) target = $region25
    $region24: #{tpu_custom_call.1} parent=1 // pred_region
      %66 = dma.done [#allocation3], 128
    $region25: #{tpu_custom_call.1} parent=1 // pred_fallthru
      _
    // Predicated region
    $region26: #{tpu_custom_call.1} parent=1 // pred_check
      _
    $region27: #{tpu_custom_call.1} parent=1 // pred_check_branch
      %68 = sbr.rel (0) target = $region29
    $region28: #{tpu_custom_call.1} parent=1 // pred_region
      %69 = dma.done [#allocation6], 128
    $region29: #{tpu_custom_call.1} parent=1 // pred_fallthru
      _
    // Predicated region
    $region30: #{tpu_custom_call.1} parent=1 // pred_check
      _
    $region31: #{tpu_custom_call.1} parent=1 // pred_check_branch
      %71 = sbr.rel (0) target = $region33
    $region32: #{tpu_custom_call.1} parent=1 // pred_region
      %72 = dma.done [#allocation6], 256
    $region33: #{tpu_custom_call.1} parent=1 // pred_fallthru
      _
    // Predicated region
    $region34: #{tpu_custom_call.1} parent=1 // pred_check
      _
    $region35: #{tpu_custom_call.1} parent=1 // pred_check_branch
      %74 = sbr.rel (0) target = $region37
    $region36: #{tpu_custom_call.1} parent=1 // pred_region
      %75 = dma.done [#allocation9], 256
    $region37: #{tpu_custom_call.1} parent=1 // pred_fallthru
      _
    %v77 = vld [vmem:[#allocation2] sm:$0xf]
    %v78 = vld [vmem:[#allocation2 + $0x4] sm:$0xf]
    %v79 = vld [vmem:[#allocation7] sm:$0xf]
    %v80 = vld [vmem:[#allocation7 + $0x4] sm:$0xf]
    %v81 = vld [vmem:[#allocation7 + $0x8] sm:$0xf]
    %v82 = vld [vmem:[#allocation7 + $0xc] sm:$0xf]
    %v85 = vunpack.c.l.b16 %v77
    %v86 = vunpack.c.l.b16 %v78
    %v87 = vpack.c.b16 %v86, %v85
    %v92 = vunpack.c.l.b16 %v79
    %v93 = vunpack.c.l.b16 %v80
    %v94 = vunpack.c.l.b16 %v81
    %v95 = vunpack.c.l.b16 %v82
    %v96 = vpack.c.b16 %v93, %v92
    %v97 = vpack.c.b16 %v95, %v94
    %vm100 = vcmask 261120
    %v102 = vsel %vm100, %v87, 0
    %104 = vmatprep.subr.bf16.mxu0 0
    %105 = vmatpush1.bf16.msra.mxu0 %v96
    %106 = vmatprep.subr.bf16.mxu0 0
    %107 = vmatpush1.bf16.msra.mxu0 %v97
    %108 = vmatprep.subr.bf16.mxu0 0
    %109 = vmatpush1.bf16.msra.mxu0 0
    %110 = vmatprep.subr.bf16.mxu0 0
    %111 = vmatpush1.bf16.msra.mxu0 0
    %112 = vmatprep.subr.bf16.mxu0 0
    %113 = vmatpush1.bf16.msra.mxu0 0
    %114 = vmatprep.subr.bf16.mxu0 0
    %115 = vmatpush1.bf16.msra.mxu0 0
    %116 = vmatprep.subr.bf16.mxu0 0
    %117 = vmatpush1.bf16.msra.mxu0 0
    %118 = vmatprep.subr.bf16.mxu0 0
    %119 = vmatpush1.bf16.msra.mxu0 0
    %120 = vmatprep.subr.bf16.mxu0 0
    %121 = vmatpush1.bf16.msra.mxu0 0
    %122 = vmatprep.subr.bf16.mxu0 0
    %123 = vmatpush1.bf16.msra.mxu0 0
    %124 = vmatprep.subr.bf16.mxu0 0
    %125 = vmatpush1.bf16.msra.mxu0 0
    %126 = vmatprep.subr.bf16.mxu0 0
    %127 = vmatpush1.bf16.msra.mxu0 0
    %128 = vmatprep.subr.bf16.mxu0 0
    %129 = vmatpush1.bf16.msra.mxu0 0
    %130 = vmatprep.subr.bf16.mxu0 0
    %131 = vmatpush1.bf16.msra.mxu0 0
    %132 = vmatprep.subr.bf16.mxu0 0
    %133 = vmatpush1.bf16.msra.mxu0 0
    %134 = vmatprep.subr.bf16.mxu0 0
    %135 = vmatpush1.bf16.msra.mxu0 0
    %136 = vmatprep.mubr.bf16.mxu0 0
    %137 = vmatmul.mubr.bf16.gmra.mrb[0].mxu0 %v102
    %v138 = vpop.f32.mrb[0].mxu0
    %v139 = vadd.f32 0.0, %v138
    %v140 = vpop.f32.mrb[0].mxu0
    %v141 = vpop.f32.mrb[0].mxu0
    %v142 = vadd.f32 0.0, %v141
    %v143 = vpop.f32.mrb[0].mxu0
    %144 = vdwg.mxu0
    %146 = vrot.lane.b32.xlu0 %v139, 120
    %v147 = vpop.permute.xlu0 %146
    %149 = vrot.lane.b32.xlu0 %v139, 112
    %v150 = vpop.permute.xlu0 %149
    %152 = vrot.lane.b32.xlu0 %v139, 104
    %v153 = vpop.permute.xlu0 %152
    %155 = vrot.lane.b32.xlu0 %v139, 96
    %v156 = vpop.permute.xlu0 %155
    %158 = vrot.lane.b32.xlu0 %v139, 88
    %v159 = vpop.permute.xlu0 %158
    %161 = vrot.lane.b32.xlu0 %v139, 80
    %v162 = vpop.permute.xlu0 %161
    %164 = vrot.lane.b32.xlu0 %v139, 72
    %v165 = vpop.permute.xlu0 %164
    %167 = vrot.lane.b32.xlu0 %v139, 64
    %v168 = vpop.permute.xlu0 %167
    %170 = vrot.lane.b32.xlu0 %v139, 56
    %v171 = vpop.permute.xlu0 %170
    %173 = vrot.lane.b32.xlu0 %v139, 48
    %v174 = vpop.permute.xlu0 %173
    %176 = vrot.lane.b32.xlu0 %v139, 40
    %v177 = vpop.permute.xlu0 %176
    %v179 = vcombine.low %v139, %v150
    %v180 = vcombine.high %v139, %v150
    %v182 = vunpack.c.l.s4 1983009808
    %v183 = vunpack.c.0.s8 %v182
    %v184 = vlaneseq
    %v185 = vshrl.u32 %v184, 7
    %v186 = vsub.s32 %v183, %v185
    %v187 = vrot.slane %v179, %v186
    %v189 = vunpack.c.l.s4 1983009808
    %v190 = vunpack.c.0.s8 %v189
    %v191 = vlaneseq
    %v192 = vshrl.u32 %v191, 7
    %v193 = vsub.s32 %v190, %v192
    %v194 = vrot.slane %v180, %v193
    %v195 = vcombine.low %v147, %v153
    %v196 = vcombine.high %v147, %v153
    %v198 = vunpack.c.l.s4 1983009808
    %v199 = vunpack.c.0.s8 %v198
    %v200 = vlaneseq
    %v201 = vshrl.u32 %v200, 7
    %v202 = vsub.s32 %v199, %v201
    %v203 = vrot.slane %v195, %v202
    %v205 = vunpack.c.l.s4 1983009808
    %v206 = vunpack.c.0.s8 %v205
    %v207 = vlaneseq
    %v208 = vshrl.u32 %v207, 7
    %v209 = vsub.s32 %v206, %v208
    %v210 = vrot.slane %v196, %v209
    %v211 = vcombine.low %v156, %v162
    %v212 = vcombine.high %v156, %v162
    %v214 = vunpack.c.l.s4 1983009808
    %v215 = vunpack.c.0.s8 %v214
    %v216 = vlaneseq
    %v217 = vshrl.u32 %v216, 7
    %v218 = vsub.s32 %v215, %v217
    %v219 = vrot.slane %v211, %v218
    %v221 = vunpack.c.l.s4 1983009808
    %v222 = vunpack.c.0.s8 %v221
    %v223 = vlaneseq
    %v224 = vshrl.u32 %v223, 7
    %v225 = vsub.s32 %v222, %v224
    %v226 = vrot.slane %v212, %v225
    %v227 = vcombine.low %v159, %v165
    %v228 = vcombine.high %v159, %v165
    %v230 = vunpack.c.l.s4 1983009808
    %v231 = vunpack.c.0.s8 %v230
    %v232 = vlaneseq
    %v233 = vshrl.u32 %v232, 7
    %v234 = vsub.s32 %v231, %v233
    %v235 = vrot.slane %v227, %v234
    %v237 = vunpack.c.l.s4 1983009808
    %v238 = vunpack.c.0.s8 %v237
    %v239 = vlaneseq
    %v240 = vshrl.u32 %v239, 7
    %v241 = vsub.s32 %v238, %v240
    %v242 = vrot.slane %v228, %v241
    %v243 = vcombine.low %v187, %v203
    %v244 = vcombine.high %v187, %v203
    %v246 = vunpack.c.l.s4 1934713408
    %v247 = vunpack.c.0.s8 %v246
    %v248 = vlaneseq
    %v249 = vshrl.u32 %v248, 7
    %v250 = vsub.s32 %v247, %v249
    %v251 = vrot.slane %v243, %v250
    %v253 = vunpack.c.l.s4 1934713408
    %v254 = vunpack.c.0.s8 %v253
    %v255 = vlaneseq
    %v256 = vshrl.u32 %v255, 7
    %v257 = vsub.s32 %v254, %v256
    %v258 = vrot.slane %v244, %v257
    %v259 = vcombine.low %v194, %v210
    %v260 = vcombine.high %v194, %v210
    %v262 = vunpack.c.l.s4 1934713408
    %v263 = vunpack.c.0.s8 %v262
    %v264 = vlaneseq
    %v265 = vshrl.u32 %v264, 7
    %v266 = vsub.s32 %v263, %v265
    %v267 = vrot.slane %v259, %v266
    %v269 = vunpack.c.l.s4 1934713408
    %v270 = vunpack.c.0.s8 %v269
    %v271 = vlaneseq
    %v272 = vshrl.u32 %v271, 7
    %v273 = vsub.s32 %v270, %v272
    %v274 = vrot.slane %v260, %v273
    %v275 = vcombine.low %v219, %v235
    %v276 = vcombine.high %v219, %v235
    %v278 = vunpack.c.l.s4 1934713408
    %v279 = vunpack.c.0.s8 %v278
    %v280 = vlaneseq
    %v281 = vshrl.u32 %v280, 7
    %v282 = vsub.s32 %v279, %v281
    %v283 = vrot.slane %v275, %v282
    %v285 = vunpack.c.l.s4 1934713408
    %v286 = vunpack.c.0.s8 %v285
    %v287 = vlaneseq
    %v288 = vshrl.u32 %v287, 7
    %v289 = vsub.s32 %v286, %v288
    %v290 = vrot.slane %v276, %v289
    %v291 = vcombine.low %v226, %v242
    %v292 = vcombine.high %v226, %v242
    %v294 = vunpack.c.l.s4 1934713408
    %v295 = vunpack.c.0.s8 %v294
    %v296 = vlaneseq
    %v297 = vshrl.u32 %v296, 7
    %v298 = vsub.s32 %v295, %v297
    %v299 = vrot.slane %v291, %v298
    %v301 = vunpack.c.l.s4 1934713408
    %v302 = vunpack.c.0.s8 %v301
    %v303 = vlaneseq
    %v304 = vshrl.u32 %v303, 7
    %v305 = vsub.s32 %v302, %v304
    %v306 = vrot.slane %v292, %v305
    %v307 = vcombine.low %v251, %v283
    %v308 = vcombine.high %v251, %v283
    %v309 = vcombine.low %v258, %v290
    %v310 = vcombine.high %v258, %v290
    %v311 = vcombine.low %v267, %v299
    %v312 = vcombine.high %v267, %v299
    %v313 = vcombine.low %v274, %v306
    %v314 = vcombine.high %v274, %v306
    %v315 = vcombine.low %v168, %v174
    %v316 = vcombine.high %v168, %v174
    %v318 = vunpack.c.l.s4 1983009808
    %v319 = vunpack.c.0.s8 %v318
    %v320 = vlaneseq
    %v321 = vshrl.u32 %v320, 7
    %v322 = vsub.s32 %v319, %v321
    %v323 = vrot.slane %v315, %v322
    %v325 = vunpack.c.l.s4 1983009808
    %v326 = vunpack.c.0.s8 %v325
    %v327 = vlaneseq
    %v328 = vshrl.u32 %v327, 7
    %v329 = vsub.s32 %v326, %v328
    %v330 = vrot.slane %v316, %v329
    %v331 = vcombine.low %v171, %v177
    %v332 = vcombine.high %v171, %v177
    %v334 = vunpack.c.l.s4 1983009808
    %v335 = vunpack.c.0.s8 %v334
    %v336 = vlaneseq
    %v337 = vshrl.u32 %v336, 7
    %v338 = vsub.s32 %v335, %v337
    %v339 = vrot.slane %v331, %v338
    %v341 = vunpack.c.l.s4 1983009808
    %v342 = vunpack.c.0.s8 %v341
    %v343 = vlaneseq
    %v344 = vshrl.u32 %v343, 7
    %v345 = vsub.s32 %v342, %v344
    %v346 = vrot.slane %v332, %v345
    %v347 = vcombine.low %v323, %v339
    %v348 = vcombine.high %v323, %v339
    %v350 = vunpack.c.l.s4 1934713408
    %v351 = vunpack.c.0.s8 %v350
    %v352 = vlaneseq
    %v353 = vshrl.u32 %v352, 7
    %v354 = vsub.s32 %v351, %v353
    %v355 = vrot.slane %v347, %v354
    %v357 = vunpack.c.l.s4 1934713408
    %v358 = vunpack.c.0.s8 %v357
    %v359 = vlaneseq
    %v360 = vshrl.u32 %v359, 7
    %v361 = vsub.s32 %v358, %v360
    %v362 = vrot.slane %v348, %v361
    %v363 = vcombine.low %v330, %v346
    %v364 = vcombine.high %v330, %v346
    %v366 = vunpack.c.l.s4 1934713408
    %v367 = vunpack.c.0.s8 %v366
    %v368 = vlaneseq
    %v369 = vshrl.u32 %v368, 7
    %v370 = vsub.s32 %v367, %v369
    %v371 = vrot.slane %v363, %v370
    %v373 = vunpack.c.l.s4 1934713408
    %v374 = vunpack.c.0.s8 %v373
    %v375 = vlaneseq
    %v376 = vshrl.u32 %v375, 7
    %v377 = vsub.s32 %v374, %v376
    %v378 = vrot.slane %v364, %v377
    %v379 = vcombine.high %v355, 0.0
    %v380 = vcombine.high %v362, 0.0
    %v381 = vcombine.high %v371, 0.0
    %v382 = vcombine.high %v378, 0.0
    %v383 = vcombine.low %v307, %v309
    %v384 = vcombine.high %v307, %v309
    %v386 = vunpack.c.l.s4 1983009808
    %v387 = vunpack.c.0.s8 %v386
    %v388 = vlaneseq
    %v389 = vshrl.u32 %v388, 7
    %v390 = vsub.s32 %v387, %v389
    %v391 = vrot.slane %v383, %v390
    %v393 = vunpack.c.l.s4 1983009808
    %v394 = vunpack.c.0.s8 %v393
    %v395 = vlaneseq
    %v396 = vshrl.u32 %v395, 7
    %v397 = vsub.s32 %v394, %v396
    %v398 = vrot.slane %v384, %v397
    %v399 = vcombine.low %v308, %v310
    %v400 = vcombine.high %v308, %v310
    %v402 = vunpack.c.l.s4 1983009808
    %v403 = vunpack.c.0.s8 %v402
    %v404 = vlaneseq
    %v405 = vshrl.u32 %v404, 7
    %v406 = vsub.s32 %v403, %v405
    %v407 = vrot.slane %v399, %v406
    %v409 = vunpack.c.l.s4 1983009808
    %v410 = vunpack.c.0.s8 %v409
    %v411 = vlaneseq
    %v412 = vshrl.u32 %v411, 7
    %v413 = vsub.s32 %v410, %v412
    %v414 = vrot.slane %v400, %v413
    %v415 = vcombine.low %v311, %v313
    %v416 = vcombine.high %v311, %v313
    %v418 = vunpack.c.l.s4 1983009808
    %v419 = vunpack.c.0.s8 %v418
    %v420 = vlaneseq
    %v421 = vshrl.u32 %v420, 7
    %v422 = vsub.s32 %v419, %v421
    %v423 = vrot.slane %v415, %v422
    %v425 = vunpack.c.l.s4 1983009808
    %v426 = vunpack.c.0.s8 %v425
    %v427 = vlaneseq
    %v428 = vshrl.u32 %v427, 7
    %v429 = vsub.s32 %v426, %v428
    %v430 = vrot.slane %v416, %v429
    %v431 = vcombine.low %v312, %v314
    %v432 = vcombine.high %v312, %v314
    %v434 = vunpack.c.l.s4 1983009808
    %v435 = vunpack.c.0.s8 %v434
    %v436 = vlaneseq
    %v437 = vshrl.u32 %v436, 7
    %v438 = vsub.s32 %v435, %v437
    %v439 = vrot.slane %v431, %v438
    %v441 = vunpack.c.l.s4 1983009808
    %v442 = vunpack.c.0.s8 %v441
    %v443 = vlaneseq
    %v444 = vshrl.u32 %v443, 7
    %v445 = vsub.s32 %v442, %v444
    %v446 = vrot.slane %v432, %v445
    %v447 = vcombine.low %v391, %v407
    %v448 = vcombine.high %v391, %v407
    %v450 = vunpack.c.l.s4 1934713408
    %v451 = vunpack.c.0.s8 %v450
    %v452 = vlaneseq
    %v453 = vshrl.u32 %v452, 7
    %v454 = vsub.s32 %v451, %v453
    %v455 = vrot.slane %v447, %v454
    %v457 = vunpack.c.l.s4 1934713408
    %v458 = vunpack.c.0.s8 %v457
    %v459 = vlaneseq
    %v460 = vshrl.u32 %v459, 7
    %v461 = vsub.s32 %v458, %v460
    %v462 = vrot.slane %v448, %v461
    %v463 = vcombine.low %v398, %v414
    %v464 = vcombine.high %v398, %v414
    %v466 = vunpack.c.l.s4 1934713408
    %v467 = vunpack.c.0.s8 %v466
    %v468 = vlaneseq
    %v469 = vshrl.u32 %v468, 7
    %v470 = vsub.s32 %v467, %v469
    %v471 = vrot.slane %v463, %v470
    %v473 = vunpack.c.l.s4 1934713408
    %v474 = vunpack.c.0.s8 %v473
    %v475 = vlaneseq
    %v476 = vshrl.u32 %v475, 7
    %v477 = vsub.s32 %v474, %v476
    %v478 = vrot.slane %v464, %v477
    %v479 = vcombine.low %v423, %v439
    %v480 = vcombine.high %v423, %v439
    %v482 = vunpack.c.l.s4 1934713408
    %v483 = vunpack.c.0.s8 %v482
    %v484 = vlaneseq
    %v485 = vshrl.u32 %v484, 7
    %v486 = vsub.s32 %v483, %v485
    %v487 = vrot.slane %v479, %v486
    %v489 = vunpack.c.l.s4 1934713408
    %v490 = vunpack.c.0.s8 %v489
    %v491 = vlaneseq
    %v492 = vshrl.u32 %v491, 7
    %v493 = vsub.s32 %v490, %v492
    %v494 = vrot.slane %v480, %v493
    %v495 = vcombine.low %v430, %v446
    %v496 = vcombine.high %v430, %v446
    %v498 = vunpack.c.l.s4 1934713408
    %v499 = vunpack.c.0.s8 %v498
    %v500 = vlaneseq
    %v501 = vshrl.u32 %v500, 7
    %v502 = vsub.s32 %v499, %v501
    %v503 = vrot.slane %v495, %v502
    %v505 = vunpack.c.l.s4 1934713408
    %v506 = vunpack.c.0.s8 %v505
    %v507 = vlaneseq
    %v508 = vshrl.u32 %v507, 7
    %v509 = vsub.s32 %v506, %v508
    %v510 = vrot.slane %v496, %v509
    %v511 = vcombine.low %v455, %v487
    %v512 = vcombine.high %v455, %v487
    %v513 = vcombine.low %v462, %v494
    %v514 = vcombine.high %v462, %v494
    %v515 = vcombine.low %v471, %v503
    %v516 = vcombine.high %v471, %v503
    %v517 = vcombine.low %v478, %v510
    %v518 = vcombine.high %v478, %v510
    %v519 = vcombine.low %v355, %v362
    %v521 = vunpack.c.l.s4 1983009808
    %v522 = vunpack.c.0.s8 %v521
    %v523 = vlaneseq
    %v524 = vshrl.u32 %v523, 7
    %v525 = vsub.s32 %v522, %v524
    %v526 = vrot.slane %v519, %v525
    %v527 = vcombine.low %v379, %v380
    %v529 = vunpack.c.l.s4 1983009808
    %v530 = vunpack.c.0.s8 %v529
    %v531 = vlaneseq
    %v532 = vshrl.u32 %v531, 7
    %v533 = vsub.s32 %v530, %v532
    %v534 = vrot.slane %v527, %v533
    %v535 = vcombine.low %v371, %v378
    %v537 = vunpack.c.l.s4 1983009808
    %v538 = vunpack.c.0.s8 %v537
    %v539 = vlaneseq
    %v540 = vshrl.u32 %v539, 7
    %v541 = vsub.s32 %v538, %v540
    %v542 = vrot.slane %v535, %v541
    %v543 = vcombine.low %v381, %v382
    %v545 = vunpack.c.l.s4 1983009808
    %v546 = vunpack.c.0.s8 %v545
    %v547 = vlaneseq
    %v548 = vshrl.u32 %v547, 7
    %v549 = vsub.s32 %v546, %v548
    %v550 = vrot.slane %v543, %v549
    %v551 = vcombine.low %v526, %v534
    %v552 = vcombine.high %v526, %v534
    %v554 = vunpack.c.l.s4 1934713408
    %v555 = vunpack.c.0.s8 %v554
    %v556 = vlaneseq
    %v557 = vshrl.u32 %v556, 7
    %v558 = vsub.s32 %v555, %v557
    %v559 = vrot.slane %v551, %v558
    %v561 = vunpack.c.l.s4 1934713408
    %v562 = vunpack.c.0.s8 %v561
    %v563 = vlaneseq
    %v564 = vshrl.u32 %v563, 7
    %v565 = vsub.s32 %v562, %v564
    %v566 = vrot.slane %v552, %v565
    %v567 = vcombine.low %v542, %v550
    %v568 = vcombine.high %v542, %v550
    %v570 = vunpack.c.l.s4 1934713408
    %v571 = vunpack.c.0.s8 %v570
    %v572 = vlaneseq
    %v573 = vshrl.u32 %v572, 7
    %v574 = vsub.s32 %v571, %v573
    %v575 = vrot.slane %v567, %v574
    %v577 = vunpack.c.l.s4 1934713408
    %v578 = vunpack.c.0.s8 %v577
    %v579 = vlaneseq
    %v580 = vshrl.u32 %v579, 7
    %v581 = vsub.s32 %v578, %v580
    %v582 = vrot.slane %v568, %v581
    %v583 = vcombine.low %v559, %v575
    %v584 = vcombine.high %v559, %v575
    %v585 = vcombine.low %v566, %v582
    %v586 = vcombine.high %v566, %v582
    %588 = vrot.lane.b32.xlu0 %v142, 120
    %v589 = vpop.permute.xlu0 %588
    %591 = vrot.lane.b32.xlu0 %v142, 112
    %v592 = vpop.permute.xlu0 %591
    %594 = vrot.lane.b32.xlu0 %v142, 104
    %v595 = vpop.permute.xlu0 %594
    %597 = vrot.lane.b32.xlu0 %v142, 96
    %v598 = vpop.permute.xlu0 %597
    %600 = vrot.lane.b32.xlu0 %v142, 88
    %v601 = vpop.permute.xlu0 %600
    %603 = vrot.lane.b32.xlu0 %v142, 80
    %v604 = vpop.permute.xlu0 %603
    %606 = vrot.lane.b32.xlu0 %v142, 72
    %v607 = vpop.permute.xlu0 %606
    %609 = vrot.lane.b32.xlu0 %v142, 64
    %v610 = vpop.permute.xlu0 %609
    %612 = vrot.lane.b32.xlu0 %v142, 56
    %v613 = vpop.permute.xlu0 %612
    %615 = vrot.lane.b32.xlu0 %v142, 48
    %v616 = vpop.permute.xlu0 %615
    %618 = vrot.lane.b32.xlu0 %v142, 40
    %v619 = vpop.permute.xlu0 %618
    %v621 = vcombine.low %v142, %v592
    %v622 = vcombine.high %v142, %v592
    %v624 = vunpack.c.l.s4 1983009808
    %v625 = vunpack.c.0.s8 %v624
    %v626 = vlaneseq
    %v627 = vshrl.u32 %v626, 7
    %v628 = vsub.s32 %v625, %v627
    %v629 = vrot.slane %v621, %v628
    %v631 = vunpack.c.l.s4 1983009808
    %v632 = vunpack.c.0.s8 %v631
    %v633 = vlaneseq
    %v634 = vshrl.u32 %v633, 7
    %v635 = vsub.s32 %v632, %v634
    %v636 = vrot.slane %v622, %v635
    %v637 = vcombine.low %v589, %v595
    %v638 = vcombine.high %v589, %v595
    %v640 = vunpack.c.l.s4 1983009808
    %v641 = vunpack.c.0.s8 %v640
    %v642 = vlaneseq
    %v643 = vshrl.u32 %v642, 7
    %v644 = vsub.s32 %v641, %v643
    %v645 = vrot.slane %v637, %v644
    %v647 = vunpack.c.l.s4 1983009808
    %v648 = vunpack.c.0.s8 %v647
    %v649 = vlaneseq
    %v650 = vshrl.u32 %v649, 7
    %v651 = vsub.s32 %v648, %v650
    %v652 = vrot.slane %v638, %v651
    %v653 = vcombine.low %v598, %v604
    %v654 = vcombine.high %v598, %v604
    %v656 = vunpack.c.l.s4 1983009808
    %v657 = vunpack.c.0.s8 %v656
    %v658 = vlaneseq
    %v659 = vshrl.u32 %v658, 7
    %v660 = vsub.s32 %v657, %v659
    %v661 = vrot.slane %v653, %v660
    %v663 = vunpack.c.l.s4 1983009808
    %v664 = vunpack.c.0.s8 %v663
    %v665 = vlaneseq
    %v666 = vshrl.u32 %v665, 7
    %v667 = vsub.s32 %v664, %v666
    %v668 = vrot.slane %v654, %v667
    %v669 = vcombine.low %v601, %v607
    %v670 = vcombine.high %v601, %v607
    %v672 = vunpack.c.l.s4 1983009808
    %v673 = vunpack.c.0.s8 %v672
    %v674 = vlaneseq
    %v675 = vshrl.u32 %v674, 7
    %v676 = vsub.s32 %v673, %v675
    %v677 = vrot.slane %v669, %v676
    %v679 = vunpack.c.l.s4 1983009808
    %v680 = vunpack.c.0.s8 %v679
    %v681 = vlaneseq
    %v682 = vshrl.u32 %v681, 7
    %v683 = vsub.s32 %v680, %v682
    %v684 = vrot.slane %v670, %v683
    %v685 = vcombine.low %v629, %v645
    %v686 = vcombine.high %v629, %v645
    %v688 = vunpack.c.l.s4 1934713408
    %v689 = vunpack.c.0.s8 %v688
    %v690 = vlaneseq
    %v691 = vshrl.u32 %v690, 7
    %v692 = vsub.s32 %v689, %v691
    %v693 = vrot.slane %v685, %v692
    %v695 = vunpack.c.l.s4 1934713408
    %v696 = vunpack.c.0.s8 %v695
    %v697 = vlaneseq
    %v698 = vshrl.u32 %v697, 7
    %v699 = vsub.s32 %v696, %v698
    %v700 = vrot.slane %v686, %v699
    %v701 = vcombine.low %v636, %v652
    %v702 = vcombine.high %v636, %v652
    %v704 = vunpack.c.l.s4 1934713408
    %v705 = vunpack.c.0.s8 %v704
    %v706 = vlaneseq
    %v707 = vshrl.u32 %v706, 7
    %v708 = vsub.s32 %v705, %v707
    %v709 = vrot.slane %v701, %v708
    %v711 = vunpack.c.l.s4 1934713408
    %v712 = vunpack.c.0.s8 %v711
    %v713 = vlaneseq
    %v714 = vshrl.u32 %v713, 7
    %v715 = vsub.s32 %v712, %v714
    %v716 = vrot.slane %v702, %v715
    %v717 = vcombine.low %v661, %v677
    %v718 = vcombine.high %v661, %v677
    %v720 = vunpack.c.l.s4 1934713408
    %v721 = vunpack.c.0.s8 %v720
    %v722 = vlaneseq
    %v723 = vshrl.u32 %v722, 7
    %v724 = vsub.s32 %v721, %v723
    %v725 = vrot.slane %v717, %v724
    %v727 = vunpack.c.l.s4 1934713408
    %v728 = vunpack.c.0.s8 %v727
    %v729 = vlaneseq
    %v730 = vshrl.u32 %v729, 7
    %v731 = vsub.s32 %v728, %v730
    %v732 = vrot.slane %v718, %v731
    %v733 = vcombine.low %v668, %v684
    %v734 = vcombine.high %v668, %v684
    %v736 = vunpack.c.l.s4 1934713408
    %v737 = vunpack.c.0.s8 %v736
    %v738 = vlaneseq
    %v739 = vshrl.u32 %v738, 7
    %v740 = vsub.s32 %v737, %v739
    %v741 = vrot.slane %v733, %v740
    %v743 = vunpack.c.l.s4 1934713408
    %v744 = vunpack.c.0.s8 %v743
    %v745 = vlaneseq
    %v746 = vshrl.u32 %v745, 7
    %v747 = vsub.s32 %v744, %v746
    %v748 = vrot.slane %v734, %v747
    %v749 = vcombine.low %v693, %v725
    %v750 = vcombine.high %v693, %v725
    %v751 = vcombine.low %v700, %v732
    %v752 = vcombine.high %v700, %v732
    %v753 = vcombine.low %v709, %v741
    %v754 = vcombine.high %v709, %v741
    %v755 = vcombine.low %v716, %v748
    %v756 = vcombine.high %v716, %v748
    %v757 = vcombine.low %v610, %v616
    %v758 = vcombine.high %v610, %v616
    %v760 = vunpack.c.l.s4 1983009808
    %v761 = vunpack.c.0.s8 %v760
    %v762 = vlaneseq
    %v763 = vshrl.u32 %v762, 7
    %v764 = vsub.s32 %v761, %v763
    %v765 = vrot.slane %v757, %v764
    %v767 = vunpack.c.l.s4 1983009808
    %v768 = vunpack.c.0.s8 %v767
    %v769 = vlaneseq
    %v770 = vshrl.u32 %v769, 7
    %v771 = vsub.s32 %v768, %v770
    %v772 = vrot.slane %v758, %v771
    %v773 = vcombine.low %v613, %v619
    %v774 = vcombine.high %v613, %v619
    %v776 = vunpack.c.l.s4 1983009808
    %v777 = vunpack.c.0.s8 %v776
    %v778 = vlaneseq
    %v779 = vshrl.u32 %v778, 7
    %v780 = vsub.s32 %v777, %v779
    %v781 = vrot.slane %v773, %v780
    %v783 = vunpack.c.l.s4 1983009808
    %v784 = vunpack.c.0.s8 %v783
    %v785 = vlaneseq
    %v786 = vshrl.u32 %v785, 7
    %v787 = vsub.s32 %v784, %v786
    %v788 = vrot.slane %v774, %v787
    %v789 = vcombine.low %v765, %v781
    %v790 = vcombine.high %v765, %v781
    %v792 = vunpack.c.l.s4 1934713408
    %v793 = vunpack.c.0.s8 %v792
    %v794 = vlaneseq
    %v795 = vshrl.u32 %v794, 7
    %v796 = vsub.s32 %v793, %v795
    %v797 = vrot.slane %v789, %v796
    %v799 = vunpack.c.l.s4 1934713408
    %v800 = vunpack.c.0.s8 %v799
    %v801 = vlaneseq
    %v802 = vshrl.u32 %v801, 7
    %v803 = vsub.s32 %v800, %v802
    %v804 = vrot.slane %v790, %v803
    %v805 = vcombine.low %v772, %v788
    %v806 = vcombine.high %v772, %v788
    %v808 = vunpack.c.l.s4 1934713408
    %v809 = vunpack.c.0.s8 %v808
    %v810 = vlaneseq
    %v811 = vshrl.u32 %v810, 7
    %v812 = vsub.s32 %v809, %v811
    %v813 = vrot.slane %v805, %v812
    %v815 = vunpack.c.l.s4 1934713408
    %v816 = vunpack.c.0.s8 %v815
    %v817 = vlaneseq
    %v818 = vshrl.u32 %v817, 7
    %v819 = vsub.s32 %v816, %v818
    %v820 = vrot.slane %v806, %v819
    %v821 = vcombine.high %v797, 0.0
    %v822 = vcombine.high %v804, 0.0
    %v823 = vcombine.high %v813, 0.0
    %v824 = vcombine.high %v820, 0.0
    %v825 = vcombine.low %v749, %v751
    %v826 = vcombine.high %v749, %v751
    %v828 = vunpack.c.l.s4 1983009808
    %v829 = vunpack.c.0.s8 %v828
    %v830 = vlaneseq
    %v831 = vshrl.u32 %v830, 7
    %v832 = vsub.s32 %v829, %v831
    %v833 = vrot.slane %v825, %v832
    %v835 = vunpack.c.l.s4 1983009808
    %v836 = vunpack.c.0.s8 %v835
    %v837 = vlaneseq
    %v838 = vshrl.u32 %v837, 7
    %v839 = vsub.s32 %v836, %v838
    %v840 = vrot.slane %v826, %v839
    %v841 = vcombine.low %v750, %v752
    %v842 = vcombine.high %v750, %v752
    %v844 = vunpack.c.l.s4 1983009808
    %v845 = vunpack.c.0.s8 %v844
    %v846 = vlaneseq
    %v847 = vshrl.u32 %v846, 7
    %v848 = vsub.s32 %v845, %v847
    %v849 = vrot.slane %v841, %v848
    %v851 = vunpack.c.l.s4 1983009808
    %v852 = vunpack.c.0.s8 %v851
    %v853 = vlaneseq
    %v854 = vshrl.u32 %v853, 7
    %v855 = vsub.s32 %v852, %v854
    %v856 = vrot.slane %v842, %v855
    %v857 = vcombine.low %v753, %v755
    %v858 = vcombine.high %v753, %v755
    %v860 = vunpack.c.l.s4 1983009808
    %v861 = vunpack.c.0.s8 %v860
    %v862 = vlaneseq
    %v863 = vshrl.u32 %v862, 7
    %v864 = vsub.s32 %v861, %v863
    %v865 = vrot.slane %v857, %v864
    %v867 = vunpack.c.l.s4 1983009808
    %v868 = vunpack.c.0.s8 %v867
    %v869 = vlaneseq
    %v870 = vshrl.u32 %v869, 7
    %v871 = vsub.s32 %v868, %v870
    %v872 = vrot.slane %v858, %v871
    %v873 = vcombine.low %v754, %v756
    %v874 = vcombine.high %v754, %v756
    %v876 = vunpack.c.l.s4 1983009808
    %v877 = vunpack.c.0.s8 %v876
    %v878 = vlaneseq
    %v879 = vshrl.u32 %v878, 7
    %v880 = vsub.s32 %v877, %v879
    %v881 = vrot.slane %v873, %v880
    %v883 = vunpack.c.l.s4 1983009808
    %v884 = vunpack.c.0.s8 %v883
    %v885 = vlaneseq
    %v886 = vshrl.u32 %v885, 7
    %v887 = vsub.s32 %v884, %v886
    %v888 = vrot.slane %v874, %v887
    %v889 = vcombine.low %v833, %v849
    %v890 = vcombine.high %v833, %v849
    %v892 = vunpack.c.l.s4 1934713408
    %v893 = vunpack.c.0.s8 %v892
    %v894 = vlaneseq
    %v895 = vshrl.u32 %v894, 7
    %v896 = vsub.s32 %v893, %v895
    %v897 = vrot.slane %v889, %v896
    %v899 = vunpack.c.l.s4 1934713408
    %v900 = vunpack.c.0.s8 %v899
    %v901 = vlaneseq
    %v902 = vshrl.u32 %v901, 7
    %v903 = vsub.s32 %v900, %v902
    %v904 = vrot.slane %v890, %v903
    %v905 = vcombine.low %v840, %v856
    %v906 = vcombine.high %v840, %v856
    %v908 = vunpack.c.l.s4 1934713408
    %v909 = vunpack.c.0.s8 %v908
    %v910 = vlaneseq
    %v911 = vshrl.u32 %v910, 7
    %v912 = vsub.s32 %v909, %v911
    %v913 = vrot.slane %v905, %v912
    %v915 = vunpack.c.l.s4 1934713408
    %v916 = vunpack.c.0.s8 %v915
    %v917 = vlaneseq
    %v918 = vshrl.u32 %v917, 7
    %v919 = vsub.s32 %v916, %v918
    %v920 = vrot.slane %v906, %v919
    %v921 = vcombine.low %v865, %v881
    %v922 = vcombine.high %v865, %v881
    %v924 = vunpack.c.l.s4 1934713408
    %v925 = vunpack.c.0.s8 %v924
    %v926 = vlaneseq
    %v927 = vshrl.u32 %v926, 7
    %v928 = vsub.s32 %v925, %v927
    %v929 = vrot.slane %v921, %v928
    %v931 = vunpack.c.l.s4 1934713408
    %v932 = vunpack.c.0.s8 %v931
    %v933 = vlaneseq
    %v934 = vshrl.u32 %v933, 7
    %v935 = vsub.s32 %v932, %v934
    %v936 = vrot.slane %v922, %v935
    %v937 = vcombine.low %v872, %v888
    %v938 = vcombine.high %v872, %v888
    %v940 = vunpack.c.l.s4 1934713408
    %v941 = vunpack.c.0.s8 %v940
    %v942 = vlaneseq
    %v943 = vshrl.u32 %v942, 7
    %v944 = vsub.s32 %v941, %v943
    %v945 = vrot.slane %v937, %v944
    %v947 = vunpack.c.l.s4 1934713408
    %v948 = vunpack.c.0.s8 %v947
    %v949 = vlaneseq
    %v950 = vshrl.u32 %v949, 7
    %v951 = vsub.s32 %v948, %v950
    %v952 = vrot.slane %v938, %v951
    %v953 = vcombine.low %v897, %v929
    %v954 = vcombine.high %v897, %v929
    %v955 = vcombine.low %v904, %v936
    %v956 = vcombine.high %v904, %v936
    %v957 = vcombine.low %v913, %v945
    %v958 = vcombine.high %v913, %v945
    %v959 = vcombine.low %v920, %v952
    %v960 = vcombine.high %v920, %v952
    %v961 = vcombine.low %v797, %v804
    %v963 = vunpack.c.l.s4 1983009808
    %v964 = vunpack.c.0.s8 %v963
    %v965 = vlaneseq
    %v966 = vshrl.u32 %v965, 7
    %v967 = vsub.s32 %v964, %v966
    %v968 = vrot.slane %v961, %v967
    %v969 = vcombine.low %v821, %v822
    %v971 = vunpack.c.l.s4 1983009808
    %v972 = vunpack.c.0.s8 %v971
    %v973 = vlaneseq
    %v974 = vshrl.u32 %v973, 7
    %v975 = vsub.s32 %v972, %v974
    %v976 = vrot.slane %v969, %v975
    %v977 = vcombine.low %v813, %v820
    %v979 = vunpack.c.l.s4 1983009808
    %v980 = vunpack.c.0.s8 %v979
    %v981 = vlaneseq
    %v982 = vshrl.u32 %v981, 7
    %v983 = vsub.s32 %v980, %v982
    %v984 = vrot.slane %v977, %v983
    %v985 = vcombine.low %v823, %v824
    %v987 = vunpack.c.l.s4 1983009808
    %v988 = vunpack.c.0.s8 %v987
    %v989 = vlaneseq
    %v990 = vshrl.u32 %v989, 7
    %v991 = vsub.s32 %v988, %v990
    %v992 = vrot.slane %v985, %v991
    %v993 = vcombine.low %v968, %v976
    %v994 = vcombine.high %v968, %v976
    %v996 = vunpack.c.l.s4 1934713408
    %v997 = vunpack.c.0.s8 %v996
    %v998 = vlaneseq
    %v999 = vshrl.u32 %v998, 7
    %v1000 = vsub.s32 %v997, %v999
    %v1001 = vrot.slane %v993, %v1000
    %v1003 = vunpack.c.l.s4 1934713408
    %v1004 = vunpack.c.0.s8 %v1003
    %v1005 = vlaneseq
    %v1006 = vshrl.u32 %v1005, 7
    %v1007 = vsub.s32 %v1004, %v1006
    %v1008 = vrot.slane %v994, %v1007
    %v1009 = vcombine.low %v984, %v992
    %v1010 = vcombine.high %v984, %v992
    %v1012 = vunpack.c.l.s4 1934713408
    %v1013 = vunpack.c.0.s8 %v1012
    %v1014 = vlaneseq
    %v1015 = vshrl.u32 %v1014, 7
    %v1016 = vsub.s32 %v1013, %v1015
    %v1017 = vrot.slane %v1009, %v1016
    %v1019 = vunpack.c.l.s4 1934713408
    %v1020 = vunpack.c.0.s8 %v1019
    %v1021 = vlaneseq
    %v1022 = vshrl.u32 %v1021, 7
    %v1023 = vsub.s32 %v1020, %v1022
    %v1024 = vrot.slane %v1010, %v1023
    %v1025 = vcombine.low %v1001, %v1017
    %v1026 = vcombine.high %v1001, %v1017
    %v1027 = vcombine.low %v1008, %v1024
    %v1028 = vcombine.high %v1008, %v1024
    %v1029 = vpack.c.bf16 %v511, %v511
    %v1030 = vpack.c.bf16 %v512, %v512
    %v1031 = vpack.c.bf16 %v513, %v513
    %v1032 = vpack.c.bf16 %v514, %v514
    %v1033 = vpack.c.bf16 %v515, %v515
    %v1034 = vpack.c.bf16 %v516, %v516
    %v1035 = vpack.c.bf16 %v517, %v517
    %v1036 = vpack.c.bf16 %v518, %v518
    %v1037 = vpack.c.bf16 %v583, %v583
    %v1038 = vpack.c.bf16 %v584, %v584
    %v1039 = vpack.c.bf16 %v585, %v585
    %v1040 = vpack.c.bf16 %v586, %v586
    %v1041 = vpack.c.bf16 %v953, %v953
    %v1042 = vpack.c.bf16 %v954, %v954
    %v1043 = vpack.c.bf16 %v955, %v955
    %v1044 = vpack.c.bf16 %v956, %v956
    %v1045 = vpack.c.bf16 %v957, %v957
    %v1046 = vpack.c.bf16 %v958, %v958
    %v1047 = vpack.c.bf16 %v959, %v959
    %v1048 = vpack.c.bf16 %v960, %v960
    %v1049 = vpack.c.bf16 %v1025, %v1025
    %v1050 = vpack.c.bf16 %v1026, %v1026
    %v1051 = vpack.c.bf16 %v1027, %v1027
    %v1052 = vpack.c.bf16 %v1028, %v1028
    %v1053 = vld [vmem:[#allocation5] sm:$0x1]
    %v1054 = vld [vmem:[#allocation5 + $0x1] sm:$0x1]
    %v1055 = vld [vmem:[#allocation5 + $0x2] sm:$0x1]
    %v1056 = vld [vmem:[#allocation5 + $0x3] sm:$0x1]
    %v1057 = vld [vmem:[#allocation5 + $0x4] sm:$0x1]
    %v1058 = vld [vmem:[#allocation5 + $0x5] sm:$0x1]
    %v1059 = vld [vmem:[#allocation5 + $0x6] sm:$0x1]
    %v1060 = vld [vmem:[#allocation5 + $0x7] sm:$0x1]
    %v1069 = vlaneseq
    %v1070 = vshrl.u32 %v1069, 7
    %v1071 = vsub.s32 0, %v1070
    %v1072 = vrot.slane %v1053, %v1071
    %v1073 = vlaneseq
    %v1074 = vshrl.u32 %v1073, 7
    %v1075 = vsub.s32 0, %v1074
    %v1076 = vrot.slane %v1054, %v1075
    %v1077 = vlaneseq
    %v1078 = vshrl.u32 %v1077, 7
    %v1079 = vsub.s32 0, %v1078
    %v1080 = vrot.slane %v1055, %v1079
    %v1081 = vlaneseq
    %v1082 = vshrl.u32 %v1081, 7
    %v1083 = vsub.s32 0, %v1082
    %v1084 = vrot.slane %v1056, %v1083
    %v1085 = vlaneseq
    %v1086 = vshrl.u32 %v1085, 7
    %v1087 = vsub.s32 0, %v1086
    %v1088 = vrot.slane %v1057, %v1087
    %v1089 = vlaneseq
    %v1090 = vshrl.u32 %v1089, 7
    %v1091 = vsub.s32 0, %v1090
    %v1092 = vrot.slane %v1058, %v1091
    %v1093 = vlaneseq
    %v1094 = vshrl.u32 %v1093, 7
    %v1095 = vsub.s32 0, %v1094
    %v1096 = vrot.slane %v1059, %v1095
    %v1097 = vlaneseq
    %v1098 = vshrl.u32 %v1097, 7
    %v1099 = vsub.s32 0, %v1098
    %v1100 = vrot.slane %v1060, %v1099
    %vm1109 = vcmask 64512
    %v1111 = vsel %vm1109, %v1029, 0
    %v1114 = vsel %vm1109, %v1033, 0
    %1116 = vmatprep.subr.bf16.mxu0 0
    %1117 = vmatpush1.bf16.xpose.msra.mxu0 %v1114
    %1118 = vmatprep.subr.bf16.mxu0 0
    %1119 = vmatpush1.bf16.xpose.msra.mxu0 0
    %1120 = vmatprep.subr.bf16.mxu0 0
    %1121 = vmatpush1.bf16.xpose.msra.mxu0 0
    %1122 = vmatprep.subr.bf16.mxu0 0
    %1123 = vmatpush1.bf16.xpose.msra.mxu0 0
    %1124 = vmatprep.subr.bf16.mxu0 0
    %1125 = vmatpush1.bf16.xpose.msra.mxu0 0
    %1126 = vmatprep.subr.bf16.mxu0 0
    %1127 = vmatpush1.bf16.xpose.msra.mxu0 0
    %1128 = vmatprep.subr.bf16.mxu0 0
    %1129 = vmatpush1.bf16.xpose.msra.mxu0 0
    %1130 = vmatprep.subr.bf16.mxu0 0
    %1131 = vmatpush1.bf16.xpose.msra.mxu0 0
    %1132 = vmatprep.subr.bf16.mxu0 0
    %1133 = vmatpush1.bf16.xpose.msra.mxu0 0
    %1134 = vmatprep.subr.bf16.mxu0 0
    %1135 = vmatpush1.bf16.xpose.msra.mxu0 0
    %1136 = vmatprep.subr.bf16.mxu0 0
    %1137 = vmatpush1.bf16.xpose.msra.mxu0 0
    %1138 = vmatprep.subr.bf16.mxu0 0
    %1139 = vmatpush1.bf16.xpose.msra.mxu0 0
    %1140 = vmatprep.subr.bf16.mxu0 0
    %1141 = vmatpush1.bf16.xpose.msra.mxu0 0
    %1142 = vmatprep.subr.bf16.mxu0 0
    %1143 = vmatpush1.bf16.xpose.msra.mxu0 0
    %1144 = vmatprep.subr.bf16.mxu0 0
    %1145 = vmatpush1.bf16.xpose.msra.mxu0 0
    %1146 = vmatprep.subr.bf16.mxu0 0
    %1147 = vmatpush1.bf16.xpose.msra.mxu0 0
    %1148 = vmatprep.mubr.bf16.mxu0 0
    %1149 = vmatmul.mubr.bf16.gmra.mrb[0].mxu0 %v1111
    %v1150 = vpop.f32.mrb[0].mxu0
    %v1151 = vadd.f32 %v1072, %v1150
    %v1152 = vpop.f32.mrb[0].mxu0
    %v1153 = vpop.f32.mrb[0].mxu0
    %v1154 = vpop.f32.mrb[0].mxu0
    %1155 = vdwg.mxu0
    %v1157 = vsel %vm1109, %v1030, 0
    %v1160 = vsel %vm1109, %v1034, 0
    %1162 = vmatprep.subr.bf16.mxu0 0
    %1163 = vmatpush1.bf16.xpose.msra.mxu0 %v1160
    %1164 = vmatprep.subr.bf16.mxu0 0
    %1165 = vmatpush1.bf16.xpose.msra.mxu0 0
    %1166 = vmatprep.subr.bf16.mxu0 0
    %1167 = vmatpush1.bf16.xpose.msra.mxu0 0
    %1168 = vmatprep.subr.bf16.mxu0 0
    %1169 = vmatpush1.bf16.xpose.msra.mxu0 0
    %1170 = vmatprep.subr.bf16.mxu0 0
    %1171 = vmatpush1.bf16.xpose.msra.mxu0 0
    %1172 = vmatprep.subr.bf16.mxu0 0
    %1173 = vmatpush1.bf16.xpose.msra.mxu0 0
    %1174 = vmatprep.subr.bf16.mxu0 0
    %1175 = vmatpush1.bf16.xpose.msra.mxu0 0
    %1176 = vmatprep.subr.bf16.mxu0 0
    %1177 = vmatpush1.bf16.xpose.msra.mxu0 0
    %1178 = vmatprep.subr.bf16.mxu0 0
    %1179 = vmatpush1.bf16.xpose.msra.mxu0 0
    %1180 = vmatprep.subr.bf16.mxu0 0
    %1181 = vmatpush1.bf16.xpose.msra.mxu0 0
    %1182 = vmatprep.subr.bf16.mxu0 0
    %1183 = vmatpush1.bf16.xpose.msra.mxu0 0
    %1184 = vmatprep.subr.bf16.mxu0 0
    %1185 = vmatpush1.bf16.xpose.msra.mxu0 0
    %1186 = vmatprep.subr.bf16.mxu0 0
    %1187 = vmatpush1.bf16.xpose.msra.mxu0 0
    %1188 = vmatprep.subr.bf16.mxu0 0
    %1189 = vmatpush1.bf16.xpose.msra.mxu0 0
    %1190 = vmatprep.subr.bf16.mxu0 0
    %1191 = vmatpush1.bf16.xpose.msra.mxu0 0
    %1192 = vmatprep.subr.bf16.mxu0 0
    %1193 = vmatpush1.bf16.xpose.msra.mxu0 0
    %1194 = vmatprep.mubr.bf16.mxu0 0
    %1195 = vmatmul.mubr.bf16.gmra.mrb[0].mxu0 %v1157
    %v1196 = vpop.f32.mrb[0].mxu0
    %v1197 = vadd.f32 %v1076, %v1196
    %v1198 = vpop.f32.mrb[0].mxu0
    %v1199 = vpop.f32.mrb[0].mxu0
    %v1200 = vpop.f32.mrb[0].mxu0
    %1201 = vdwg.mxu0
    %v1203 = vsel %vm1109, %v1031, 0
    %v1206 = vsel %vm1109, %v1035, 0
    %1208 = vmatprep.subr.bf16.mxu0 0
    %1209 = vmatpush1.bf16.xpose.msra.mxu0 %v1206
    %1210 = vmatprep.subr.bf16.mxu0 0
    %1211 = vmatpush1.bf16.xpose.msra.mxu0 0
    %1212 = vmatprep.subr.bf16.mxu0 0
    %1213 = vmatpush1.bf16.xpose.msra.mxu0 0
    %1214 = vmatprep.subr.bf16.mxu0 0
    %1215 = vmatpush1.bf16.xpose.msra.mxu0 0
    %1216 = vmatprep.subr.bf16.mxu0 0
    %1217 = vmatpush1.bf16.xpose.msra.mxu0 0
    %1218 = vmatprep.subr.bf16.mxu0 0
    %1219 = vmatpush1.bf16.xpose.msra.mxu0 0
    %1220 = vmatprep.subr.bf16.mxu0 0
    %1221 = vmatpush1.bf16.xpose.msra.mxu0 0
    %1222 = vmatprep.subr.bf16.mxu0 0
    %1223 = vmatpush1.bf16.xpose.msra.mxu0 0
    %1224 = vmatprep.subr.bf16.mxu0 0
    %1225 = vmatpush1.bf16.xpose.msra.mxu0 0
    %1226 = vmatprep.subr.bf16.mxu0 0
    %1227 = vmatpush1.bf16.xpose.msra.mxu0 0
    %1228 = vmatprep.subr.bf16.mxu0 0
    %1229 = vmatpush1.bf16.xpose.msra.mxu0 0
    %1230 = vmatprep.subr.bf16.mxu0 0
    %1231 = vmatpush1.bf16.xpose.msra.mxu0 0
    %1232 = vmatprep.subr.bf16.mxu0 0
    %1233 = vmatpush1.bf16.xpose.msra.mxu0 0
    %1234 = vmatprep.subr.bf16.mxu0 0
    %1235 = vmatpush1.bf16.xpose.msra.mxu0 0
    %1236 = vmatprep.subr.bf16.mxu0 0
    %1237 = vmatpush1.bf16.xpose.msra.mxu0 0
    %1238 = vmatprep.subr.bf16.mxu0 0
    %1239 = vmatpush1.bf16.xpose.msra.mxu0 0
    %1240 = vmatprep.mubr.bf16.mxu0 0
    %1241 = vmatmul.mubr.bf16.gmra.mrb[0].mxu0 %v1203
    %v1242 = vpop.f32.mrb[0].mxu0
    %v1243 = vadd.f32 %v1080, %v1242
    %v1244 = vpop.f32.mrb[0].mxu0
    %v1245 = vpop.f32.mrb[0].mxu0
    %v1246 = vpop.f32.mrb[0].mxu0
    %1247 = vdwg.mxu0
    %v1249 = vsel %vm1109, %v1032, 0
    %v1252 = vsel %vm1109, %v1036, 0
    %1254 = vmatprep.subr.bf16.mxu0 0
    %1255 = vmatpush1.bf16.xpose.msra.mxu0 %v1252
    %1256 = vmatprep.subr.bf16.mxu0 0
    %1257 = vmatpush1.bf16.xpose.msra.mxu0 0
    %1258 = vmatprep.subr.bf16.mxu0 0
    %1259 = vmatpush1.bf16.xpose.msra.mxu0 0
    %1260 = vmatprep.subr.bf16.mxu0 0
    %1261 = vmatpush1.bf16.xpose.msra.mxu0 0
    %1262 = vmatprep.subr.bf16.mxu0 0
    %1263 = vmatpush1.bf16.xpose.msra.mxu0 0
    %1264 = vmatprep.subr.bf16.mxu0 0
    %1265 = vmatpush1.bf16.xpose.msra.mxu0 0
    %1266 = vmatprep.subr.bf16.mxu0 0
    %1267 = vmatpush1.bf16.xpose.msra.mxu0 0
    %1268 = vmatprep.subr.bf16.mxu0 0
    %1269 = vmatpush1.bf16.xpose.msra.mxu0 0
    %1270 = vmatprep.subr.bf16.mxu0 0
    %1271 = vmatpush1.bf16.xpose.msra.mxu0 0
    %1272 = vmatprep.subr.bf16.mxu0 0
    %1273 = vmatpush1.bf16.xpose.msra.mxu0 0
    %1274 = vmatprep.subr.bf16.mxu0 0
    %1275 = vmatpush1.bf16.xpose.msra.mxu0 0
    %1276 = vmatprep.subr.bf16.mxu0 0
    %1277 = vmatpush1.bf16.xpose.msra.mxu0 0
    %1278 = vmatprep.subr.bf16.mxu0 0
    %1279 = vmatpush1.bf16.xpose.msra.mxu0 0
    %1280 = vmatprep.subr.bf16.mxu0 0
    %1281 = vmatpush1.bf16.xpose.msra.mxu0 0
    %1282 = vmatprep.subr.bf16.mxu0 0
    %1283 = vmatpush1.bf16.xpose.msra.mxu0 0
    %1284 = vmatprep.subr.bf16.mxu0 0
    %1285 = vmatpush1.bf16.xpose.msra.mxu0 0
    %1286 = vmatprep.mubr.bf16.mxu0 0
    %1287 = vmatmul.mubr.bf16.gmra.mrb[0].mxu0 %v1249
    %v1288 = vpop.f32.mrb[0].mxu0
    %v1289 = vadd.f32 %v1084, %v1288
    %v1290 = vpop.f32.mrb[0].mxu0
    %v1291 = vpop.f32.mrb[0].mxu0
    %v1292 = vpop.f32.mrb[0].mxu0
    %1293 = vdwg.mxu0
    %v1295 = vsel %vm1109, %v1041, 0
    %v1298 = vsel %vm1109, %v1045, 0
    %1300 = vmatprep.subr.bf16.mxu0 0
    %1301 = vmatpush1.bf16.xpose.msra.mxu0 %v1298
    %1302 = vmatprep.subr.bf16.mxu0 0
    %1303 = vmatpush1.bf16.xpose.msra.mxu0 0
    %1304 = vmatprep.subr.bf16.mxu0 0
    %1305 = vmatpush1.bf16.xpose.msra.mxu0 0
    %1306 = vmatprep.subr.bf16.mxu0 0
    %1307 = vmatpush1.bf16.xpose.msra.mxu0 0
    %1308 = vmatprep.subr.bf16.mxu0 0
    %1309 = vmatpush1.bf16.xpose.msra.mxu0 0
    %1310 = vmatprep.subr.bf16.mxu0 0
    %1311 = vmatpush1.bf16.xpose.msra.mxu0 0
    %1312 = vmatprep.subr.bf16.mxu0 0
    %1313 = vmatpush1.bf16.xpose.msra.mxu0 0
    %1314 = vmatprep.subr.bf16.mxu0 0
    %1315 = vmatpush1.bf16.xpose.msra.mxu0 0
    %1316 = vmatprep.subr.bf16.mxu0 0
    %1317 = vmatpush1.bf16.xpose.msra.mxu0 0
    %1318 = vmatprep.subr.bf16.mxu0 0
    %1319 = vmatpush1.bf16.xpose.msra.mxu0 0
    %1320 = vmatprep.subr.bf16.mxu0 0
    %1321 = vmatpush1.bf16.xpose.msra.mxu0 0
    %1322 = vmatprep.subr.bf16.mxu0 0
    %1323 = vmatpush1.bf16.xpose.msra.mxu0 0
    %1324 = vmatprep.subr.bf16.mxu0 0
    %1325 = vmatpush1.bf16.xpose.msra.mxu0 0
    %1326 = vmatprep.subr.bf16.mxu0 0
    %1327 = vmatpush1.bf16.xpose.msra.mxu0 0
    %1328 = vmatprep.subr.bf16.mxu0 0
    %1329 = vmatpush1.bf16.xpose.msra.mxu0 0
    %1330 = vmatprep.subr.bf16.mxu0 0
    %1331 = vmatpush1.bf16.xpose.msra.mxu0 0
    %1332 = vmatprep.mubr.bf16.mxu0 0
    %1333 = vmatmul.mubr.bf16.gmra.mrb[0].mxu0 %v1295
    %v1334 = vpop.f32.mrb[0].mxu0
    %v1335 = vadd.f32 %v1088, %v1334
    %v1336 = vpop.f32.mrb[0].mxu0
    %v1337 = vpop.f32.mrb[0].mxu0
    %v1338 = vpop.f32.mrb[0].mxu0
    %1339 = vdwg.mxu0
    %v1341 = vsel %vm1109, %v1042, 0
    %v1344 = vsel %vm1109, %v1046, 0
    %1346 = vmatprep.subr.bf16.mxu0 0
    %1347 = vmatpush1.bf16.xpose.msra.mxu0 %v1344
    %1348 = vmatprep.subr.bf16.mxu0 0
    %1349 = vmatpush1.bf16.xpose.msra.mxu0 0
    %1350 = vmatprep.subr.bf16.mxu0 0
    %1351 = vmatpush1.bf16.xpose.msra.mxu0 0
    %1352 = vmatprep.subr.bf16.mxu0 0
    %1353 = vmatpush1.bf16.xpose.msra.mxu0 0
    %1354 = vmatprep.subr.bf16.mxu0 0
    %1355 = vmatpush1.bf16.xpose.msra.mxu0 0
    %1356 = vmatprep.subr.bf16.mxu0 0
    %1357 = vmatpush1.bf16.xpose.msra.mxu0 0
    %1358 = vmatprep.subr.bf16.mxu0 0
    %1359 = vmatpush1.bf16.xpose.msra.mxu0 0
    %1360 = vmatprep.subr.bf16.mxu0 0
    %1361 = vmatpush1.bf16.xpose.msra.mxu0 0
    %1362 = vmatprep.subr.bf16.mxu0 0
    %1363 = vmatpush1.bf16.xpose.msra.mxu0 0
    %1364 = vmatprep.subr.bf16.mxu0 0
    %1365 = vmatpush1.bf16.xpose.msra.mxu0 0
    %1366 = vmatprep.subr.bf16.mxu0 0
    %1367 = vmatpush1.bf16.xpose.msra.mxu0 0
    %1368 = vmatprep.subr.bf16.mxu0 0
    %1369 = vmatpush1.bf16.xpose.msra.mxu0 0
    %1370 = vmatprep.subr.bf16.mxu0 0
    %1371 = vmatpush1.bf16.xpose.msra.mxu0 0
    %1372 = vmatprep.subr.bf16.mxu0 0
    %1373 = vmatpush1.bf16.xpose.msra.mxu0 0
    %1374 = vmatprep.subr.bf16.mxu0 0
    %1375 = vmatpush1.bf16.xpose.msra.mxu0 0
    %1376 = vmatprep.subr.bf16.mxu0 0
    %1377 = vmatpush1.bf16.xpose.msra.mxu0 0
    %1378 = vmatprep.mubr.bf16.mxu0 0
    %1379 = vmatmul.mubr.bf16.gmra.mrb[0].mxu0 %v1341
    %v1380 = vpop.f32.mrb[0].mxu0
    %v1381 = vadd.f32 %v1092, %v1380
    %v1382 = vpop.f32.mrb[0].mxu0
    %v1383 = vpop.f32.mrb[0].mxu0
    %v1384 = vpop.f32.mrb[0].mxu0
    %1385 = vdwg.mxu0
    %v1387 = vsel %vm1109, %v1043, 0
    %v1390 = vsel %vm1109, %v1047, 0
    %1392 = vmatprep.subr.bf16.mxu0 0
    %1393 = vmatpush1.bf16.xpose.msra.mxu0 %v1390
    %1394 = vmatprep.subr.bf16.mxu0 0
    %1395 = vmatpush1.bf16.xpose.msra.mxu0 0
    %1396 = vmatprep.subr.bf16.mxu0 0
    %1397 = vmatpush1.bf16.xpose.msra.mxu0 0
    %1398 = vmatprep.subr.bf16.mxu0 0
    %1399 = vmatpush1.bf16.xpose.msra.mxu0 0
    %1400 = vmatprep.subr.bf16.mxu0 0
    %1401 = vmatpush1.bf16.xpose.msra.mxu0 0
    %1402 = vmatprep.subr.bf16.mxu0 0
    %1403 = vmatpush1.bf16.xpose.msra.mxu0 0
    %1404 = vmatprep.subr.bf16.mxu0 0
    %1405 = vmatpush1.bf16.xpose.msra.mxu0 0
    %1406 = vmatprep.subr.bf16.mxu0 0
    %1407 = vmatpush1.bf16.xpose.msra.mxu0 0
    %1408 = vmatprep.subr.bf16.mxu0 0
    %1409 = vmatpush1.bf16.xpose.msra.mxu0 0
    %1410 = vmatprep.subr.bf16.mxu0 0
    %1411 = vmatpush1.bf16.xpose.msra.mxu0 0
    %1412 = vmatprep.subr.bf16.mxu0 0
    %1413 = vmatpush1.bf16.xpose.msra.mxu0 0
    %1414 = vmatprep.subr.bf16.mxu0 0
    %1415 = vmatpush1.bf16.xpose.msra.mxu0 0
    %1416 = vmatprep.subr.bf16.mxu0 0
    %1417 = vmatpush1.bf16.xpose.msra.mxu0 0
    %1418 = vmatprep.subr.bf16.mxu0 0
    %1419 = vmatpush1.bf16.xpose.msra.mxu0 0
    %1420 = vmatprep.subr.bf16.mxu0 0
    %1421 = vmatpush1.bf16.xpose.msra.mxu0 0
    %1422 = vmatprep.subr.bf16.mxu0 0
    %1423 = vmatpush1.bf16.xpose.msra.mxu0 0
    %1424 = vmatprep.mubr.bf16.mxu0 0
    %1425 = vmatmul.mubr.bf16.gmra.mrb[0].mxu0 %v1387
    %v1426 = vpop.f32.mrb[0].mxu0
    %v1427 = vadd.f32 %v1096, %v1426
    %v1428 = vpop.f32.mrb[0].mxu0
    %v1429 = vpop.f32.mrb[0].mxu0
    %v1430 = vpop.f32.mrb[0].mxu0
    %1431 = vdwg.mxu0
    %v1433 = vsel %vm1109, %v1044, 0
    %v1436 = vsel %vm1109, %v1048, 0
    %1438 = vmatprep.subr.bf16.mxu0 0
    %1439 = vmatpush1.bf16.xpose.msra.mxu0 %v1436
    %1440 = vmatprep.subr.bf16.mxu0 0
    %1441 = vmatpush1.bf16.xpose.msra.mxu0 0
    %1442 = vmatprep.subr.bf16.mxu0 0
    %1443 = vmatpush1.bf16.xpose.msra.mxu0 0
    %1444 = vmatprep.subr.bf16.mxu0 0
    %1445 = vmatpush1.bf16.xpose.msra.mxu0 0
    %1446 = vmatprep.subr.bf16.mxu0 0
    %1447 = vmatpush1.bf16.xpose.msra.mxu0 0
    %1448 = vmatprep.subr.bf16.mxu0 0
    %1449 = vmatpush1.bf16.xpose.msra.mxu0 0
    %1450 = vmatprep.subr.bf16.mxu0 0
    %1451 = vmatpush1.bf16.xpose.msra.mxu0 0
    %1452 = vmatprep.subr.bf16.mxu0 0
    %1453 = vmatpush1.bf16.xpose.msra.mxu0 0
    %1454 = vmatprep.subr.bf16.mxu0 0
    %1455 = vmatpush1.bf16.xpose.msra.mxu0 0
    %1456 = vmatprep.subr.bf16.mxu0 0
    %1457 = vmatpush1.bf16.xpose.msra.mxu0 0
    %1458 = vmatprep.subr.bf16.mxu0 0
    %1459 = vmatpush1.bf16.xpose.msra.mxu0 0
    %1460 = vmatprep.subr.bf16.mxu0 0
    %1461 = vmatpush1.bf16.xpose.msra.mxu0 0
    %1462 = vmatprep.subr.bf16.mxu0 0
    %1463 = vmatpush1.bf16.xpose.msra.mxu0 0
    %1464 = vmatprep.subr.bf16.mxu0 0
    %1465 = vmatpush1.bf16.xpose.msra.mxu0 0
    %1466 = vmatprep.subr.bf16.mxu0 0
    %1467 = vmatpush1.bf16.xpose.msra.mxu0 0
    %1468 = vmatprep.subr.bf16.mxu0 0
    %1469 = vmatpush1.bf16.xpose.msra.mxu0 0
    %1470 = vmatprep.mubr.bf16.mxu0 0
    %1471 = vmatmul.mubr.bf16.gmra.mrb[0].mxu0 %v1433
    %v1472 = vpop.f32.mrb[0].mxu0
    %v1473 = vadd.f32 %v1100, %v1472
    %v1474 = vpop.f32.mrb[0].mxu0
    %v1475 = vpop.f32.mrb[0].mxu0
    %v1476 = vpop.f32.mrb[0].mxu0
    %1477 = vdwg.mxu0
    %v1478 = vsel %vm1109, %v1151, -inf
    %1479 = vmax.xlane.f32.xlu0 %v1478
    %v1480 = vpop.xlane.xlu0 %1479
    %v1481 = vsel %vm1109, %v1197, -inf
    %1482 = vmax.xlane.f32.xlu0 %v1481
    %v1483 = vpop.xlane.xlu0 %1482
    %v1484 = vsel %vm1109, %v1243, -inf
    %1485 = vmax.xlane.f32.xlu0 %v1484
    %v1486 = vpop.xlane.xlu0 %1485
    %v1487 = vsel %vm1109, %v1289, -inf
    %1488 = vmax.xlane.f32.xlu0 %v1487
    %v1489 = vpop.xlane.xlu0 %1488
    %v1490 = vsel %vm1109, %v1335, -inf
    %1491 = vmax.xlane.f32.xlu0 %v1490
    %v1492 = vpop.xlane.xlu0 %1491
    %v1493 = vsel %vm1109, %v1381, -inf
    %1494 = vmax.xlane.f32.xlu0 %v1493
    %v1495 = vpop.xlane.xlu0 %1494
    %v1496 = vsel %vm1109, %v1427, -inf
    %1497 = vmax.xlane.f32.xlu0 %v1496
    %v1498 = vpop.xlane.xlu0 %1497
    %v1499 = vsel %vm1109, %v1473, -inf
    %1500 = vmax.xlane.f32.xlu0 %v1499
    %v1501 = vpop.xlane.xlu0 %1500
    %v1502 = vsub.f32 %v1151, %v1480
    %v1503 = vsub.f32 %v1197, %v1483
    %v1504 = vsub.f32 %v1243, %v1486
    %v1505 = vsub.f32 %v1289, %v1489
    %v1506 = vsub.f32 %v1335, %v1492
    %v1507 = vsub.f32 %v1381, %v1495
    %v1508 = vsub.f32 %v1427, %v1498
    %v1509 = vsub.f32 %v1473, %v1501
    %v1510 = vmul.f32 %v1502, 1.442695
    %v1511 = vpow.pop %v1510
    %v1512 = vmul.f32 %v1503, 1.442695
    %v1513 = vpow.pop %v1512
    %v1514 = vmul.f32 %v1504, 1.442695
    %v1515 = vpow.pop %v1514
    %v1516 = vmul.f32 %v1505, 1.442695
    %v1517 = vpow.pop %v1516
    %v1518 = vmul.f32 %v1506, 1.442695
    %v1519 = vpow.pop %v1518
    %v1520 = vmul.f32 %v1507, 1.442695
    %v1521 = vpow.pop %v1520
    %v1522 = vmul.f32 %v1508, 1.442695
    %v1523 = vpow.pop %v1522
    %v1524 = vmul.f32 %v1509, 1.442695
    %v1525 = vpow.pop %v1524
    %v1526 = vsel %vm1109, %v1511, 0.0
    %1527 = vadd.xlane.f32.xlu0 %v1526
    %v1528 = vpop.xlane.xlu0 %1527
    %v1529 = vsel %vm1109, %v1513, 0.0
    %1530 = vadd.xlane.f32.xlu0 %v1529
    %v1531 = vpop.xlane.xlu0 %1530
    %v1532 = vsel %vm1109, %v1515, 0.0
    %1533 = vadd.xlane.f32.xlu0 %v1532
    %v1534 = vpop.xlane.xlu0 %1533
    %v1535 = vsel %vm1109, %v1517, 0.0
    %1536 = vadd.xlane.f32.xlu0 %v1535
    %v1537 = vpop.xlane.xlu0 %1536
    %v1538 = vsel %vm1109, %v1519, 0.0
    %1539 = vadd.xlane.f32.xlu0 %v1538
    %v1540 = vpop.xlane.xlu0 %1539
    %v1541 = vsel %vm1109, %v1521, 0.0
    %1542 = vadd.xlane.f32.xlu0 %v1541
    %v1543 = vpop.xlane.xlu0 %1542
    %v1544 = vsel %vm1109, %v1523, 0.0
    %1545 = vadd.xlane.f32.xlu0 %v1544
    %v1546 = vpop.xlane.xlu0 %1545
    %v1547 = vsel %vm1109, %v1525, 0.0
    %1548 = vadd.xlane.f32.xlu0 %v1547
    %v1549 = vpop.xlane.xlu0 %1548
    %v1550 = vrcp.pop %v1528
    %v1551 = vmul.f32 %v1511, %v1550
    %v1552 = vrcp.pop %v1531
    %v1553 = vmul.f32 %v1513, %v1552
    %v1554 = vrcp.pop %v1534
    %v1555 = vmul.f32 %v1515, %v1554
    %v1556 = vrcp.pop %v1537
    %v1557 = vmul.f32 %v1517, %v1556
    %v1558 = vrcp.pop %v1540
    %v1559 = vmul.f32 %v1519, %v1558
    %v1560 = vrcp.pop %v1543
    %v1561 = vmul.f32 %v1521, %v1560
    %v1562 = vrcp.pop %v1546
    %v1563 = vmul.f32 %v1523, %v1562
    %v1564 = vrcp.pop %v1549
    %v1565 = vmul.f32 %v1525, %v1564
    %v1566 = vpack.c.bf16 %v1551, %v1551
    %v1567 = vpack.c.bf16 %v1553, %v1553
    %v1568 = vpack.c.bf16 %v1555, %v1555
    %v1569 = vpack.c.bf16 %v1557, %v1557
    %v1570 = vpack.c.bf16 %v1559, %v1559
    %v1571 = vpack.c.bf16 %v1561, %v1561
    %v1572 = vpack.c.bf16 %v1563, %v1563
    %v1573 = vpack.c.bf16 %v1565, %v1565
    %v1575 = vsel %vm1109, %v1566, 0
    %vm1577 = vcmask 1043456
    %v1579 = vsel %vm1577, %v1037, 0
    %1581 = vmatprep.subr.bf16.mxu0 0
    %1582 = vmatpush1.bf16.msra.mxu0 %v1579
    %1583 = vmatprep.subr.bf16.mxu0 0
    %1584 = vmatpush1.bf16.msra.mxu0 0
    %1585 = vmatprep.subr.bf16.mxu0 0
    %1586 = vmatpush1.bf16.msra.mxu0 0
    %1587 = vmatprep.subr.bf16.mxu0 0
    %1588 = vmatpush1.bf16.msra.mxu0 0
    %1589 = vmatprep.subr.bf16.mxu0 0
    %1590 = vmatpush1.bf16.msra.mxu0 0
    %1591 = vmatprep.subr.bf16.mxu0 0
    %1592 = vmatpush1.bf16.msra.mxu0 0
    %1593 = vmatprep.subr.bf16.mxu0 0
    %1594 = vmatpush1.bf16.msra.mxu0 0
    %1595 = vmatprep.subr.bf16.mxu0 0
    %1596 = vmatpush1.bf16.msra.mxu0 0
    %1597 = vmatprep.subr.bf16.mxu0 0
    %1598 = vmatpush1.bf16.msra.mxu0 0
    %1599 = vmatprep.subr.bf16.mxu0 0
    %1600 = vmatpush1.bf16.msra.mxu0 0
    %1601 = vmatprep.subr.bf16.mxu0 0
    %1602 = vmatpush1.bf16.msra.mxu0 0
    %1603 = vmatprep.subr.bf16.mxu0 0
    %1604 = vmatpush1.bf16.msra.mxu0 0
    %1605 = vmatprep.subr.bf16.mxu0 0
    %1606 = vmatpush1.bf16.msra.mxu0 0
    %1607 = vmatprep.subr.bf16.mxu0 0
    %1608 = vmatpush1.bf16.msra.mxu0 0
    %1609 = vmatprep.subr.bf16.mxu0 0
    %1610 = vmatpush1.bf16.msra.mxu0 0
    %1611 = vmatprep.subr.bf16.mxu0 0
    %1612 = vmatpush1.bf16.msra.mxu0 0
    %1613 = vmatprep.mubr.bf16.mxu0 0
    %1614 = vmatmul.mubr.bf16.gmra.mrb[0].mxu0 %v1575
    %v1615 = vpop.f32.mrb[0].mxu0
    %v1616 = vadd.f32 0.0, %v1615
    %v1617 = vpop.f32.mrb[0].mxu0
    %v1618 = vpop.f32.mrb[0].mxu0
    %v1619 = vpop.f32.mrb[0].mxu0
    %1620 = vdwg.mxu0
    %v1622 = vsel %vm1109, %v1567, 0
    %v1625 = vsel %vm1577, %v1038, 0
    %1627 = vmatprep.subr.bf16.mxu0 0
    %1628 = vmatpush1.bf16.msra.mxu0 %v1625
    %1629 = vmatprep.subr.bf16.mxu0 0
    %1630 = vmatpush1.bf16.msra.mxu0 0
    %1631 = vmatprep.subr.bf16.mxu0 0
    %1632 = vmatpush1.bf16.msra.mxu0 0
    %1633 = vmatprep.subr.bf16.mxu0 0
    %1634 = vmatpush1.bf16.msra.mxu0 0
    %1635 = vmatprep.subr.bf16.mxu0 0
    %1636 = vmatpush1.bf16.msra.mxu0 0
    %1637 = vmatprep.subr.bf16.mxu0 0
    %1638 = vmatpush1.bf16.msra.mxu0 0
    %1639 = vmatprep.subr.bf16.mxu0 0
    %1640 = vmatpush1.bf16.msra.mxu0 0
    %1641 = vmatprep.subr.bf16.mxu0 0
    %1642 = vmatpush1.bf16.msra.mxu0 0
    %1643 = vmatprep.subr.bf16.mxu0 0
    %1644 = vmatpush1.bf16.msra.mxu0 0
    %1645 = vmatprep.subr.bf16.mxu0 0
    %1646 = vmatpush1.bf16.msra.mxu0 0
    %1647 = vmatprep.subr.bf16.mxu0 0
    %1648 = vmatpush1.bf16.msra.mxu0 0
    %1649 = vmatprep.subr.bf16.mxu0 0
    %1650 = vmatpush1.bf16.msra.mxu0 0
    %1651 = vmatprep.subr.bf16.mxu0 0
    %1652 = vmatpush1.bf16.msra.mxu0 0
    %1653 = vmatprep.subr.bf16.mxu0 0
    %1654 = vmatpush1.bf16.msra.mxu0 0
    %1655 = vmatprep.subr.bf16.mxu0 0
    %1656 = vmatpush1.bf16.msra.mxu0 0
    %1657 = vmatprep.subr.bf16.mxu0 0
    %1658 = vmatpush1.bf16.msra.mxu0 0
    %1659 = vmatprep.mubr.bf16.mxu0 0
    %1660 = vmatmul.mubr.bf16.gmra.mrb[0].mxu0 %v1622
    %v1661 = vpop.f32.mrb[0].mxu0
    %v1662 = vadd.f32 0.0, %v1661
    %v1663 = vpop.f32.mrb[0].mxu0
    %v1664 = vpop.f32.mrb[0].mxu0
    %v1665 = vpop.f32.mrb[0].mxu0
    %1666 = vdwg.mxu0
    %v1668 = vsel %vm1109, %v1568, 0
    %v1671 = vsel %vm1577, %v1039, 0
    %1673 = vmatprep.subr.bf16.mxu0 0
    %1674 = vmatpush1.bf16.msra.mxu0 %v1671
    %1675 = vmatprep.subr.bf16.mxu0 0
    %1676 = vmatpush1.bf16.msra.mxu0 0
    %1677 = vmatprep.subr.bf16.mxu0 0
    %1678 = vmatpush1.bf16.msra.mxu0 0
    %1679 = vmatprep.subr.bf16.mxu0 0
    %1680 = vmatpush1.bf16.msra.mxu0 0
    %1681 = vmatprep.subr.bf16.mxu0 0
    %1682 = vmatpush1.bf16.msra.mxu0 0
    %1683 = vmatprep.subr.bf16.mxu0 0
    %1684 = vmatpush1.bf16.msra.mxu0 0
    %1685 = vmatprep.subr.bf16.mxu0 0
    %1686 = vmatpush1.bf16.msra.mxu0 0
    %1687 = vmatprep.subr.bf16.mxu0 0
    %1688 = vmatpush1.bf16.msra.mxu0 0
    %1689 = vmatprep.subr.bf16.mxu0 0
    %1690 = vmatpush1.bf16.msra.mxu0 0
    %1691 = vmatprep.subr.bf16.mxu0 0
    %1692 = vmatpush1.bf16.msra.mxu0 0
    %1693 = vmatprep.subr.bf16.mxu0 0
    %1694 = vmatpush1.bf16.msra.mxu0 0
    %1695 = vmatprep.subr.bf16.mxu0 0
    %1696 = vmatpush1.bf16.msra.mxu0 0
    %1697 = vmatprep.subr.bf16.mxu0 0
    %1698 = vmatpush1.bf16.msra.mxu0 0
    %1699 = vmatprep.subr.bf16.mxu0 0
    %1700 = vmatpush1.bf16.msra.mxu0 0
    %1701 = vmatprep.subr.bf16.mxu0 0
    %1702 = vmatpush1.bf16.msra.mxu0 0
    %1703 = vmatprep.subr.bf16.mxu0 0
    %1704 = vmatpush1.bf16.msra.mxu0 0
    %1705 = vmatprep.mubr.bf16.mxu0 0
    %1706 = vmatmul.mubr.bf16.gmra.mrb[0].mxu0 %v1668
    %v1707 = vpop.f32.mrb[0].mxu0
    %v1708 = vadd.f32 0.0, %v1707
    %v1709 = vpop.f32.mrb[0].mxu0
    %v1710 = vpop.f32.mrb[0].mxu0
    %v1711 = vpop.f32.mrb[0].mxu0
    %1712 = vdwg.mxu0
    %v1714 = vsel %vm1109, %v1569, 0
    %v1717 = vsel %vm1577, %v1040, 0
    %1719 = vmatprep.subr.bf16.mxu0 0
    %1720 = vmatpush1.bf16.msra.mxu0 %v1717
    %1721 = vmatprep.subr.bf16.mxu0 0
    %1722 = vmatpush1.bf16.msra.mxu0 0
    %1723 = vmatprep.subr.bf16.mxu0 0
    %1724 = vmatpush1.bf16.msra.mxu0 0
    %1725 = vmatprep.subr.bf16.mxu0 0
    %1726 = vmatpush1.bf16.msra.mxu0 0
    %1727 = vmatprep.subr.bf16.mxu0 0
    %1728 = vmatpush1.bf16.msra.mxu0 0
    %1729 = vmatprep.subr.bf16.mxu0 0
    %1730 = vmatpush1.bf16.msra.mxu0 0
    %1731 = vmatprep.subr.bf16.mxu0 0
    %1732 = vmatpush1.bf16.msra.mxu0 0
    %1733 = vmatprep.subr.bf16.mxu0 0
    %1734 = vmatpush1.bf16.msra.mxu0 0
    %1735 = vmatprep.subr.bf16.mxu0 0
    %1736 = vmatpush1.bf16.msra.mxu0 0
    %1737 = vmatprep.subr.bf16.mxu0 0
    %1738 = vmatpush1.bf16.msra.mxu0 0
    %1739 = vmatprep.subr.bf16.mxu0 0
    %1740 = vmatpush1.bf16.msra.mxu0 0
    %1741 = vmatprep.subr.bf16.mxu0 0
    %1742 = vmatpush1.bf16.msra.mxu0 0
    %1743 = vmatprep.subr.bf16.mxu0 0
    %1744 = vmatpush1.bf16.msra.mxu0 0
    %1745 = vmatprep.subr.bf16.mxu0 0
    %1746 = vmatpush1.bf16.msra.mxu0 0
    %1747 = vmatprep.subr.bf16.mxu0 0
    %1748 = vmatpush1.bf16.msra.mxu0 0
    %1749 = vmatprep.subr.bf16.mxu0 0
    %1750 = vmatpush1.bf16.msra.mxu0 0
    %1751 = vmatprep.mubr.bf16.mxu0 0
    %1752 = vmatmul.mubr.bf16.gmra.mrb[0].mxu0 %v1714
    %v1753 = vpop.f32.mrb[0].mxu0
    %v1754 = vadd.f32 0.0, %v1753
    %v1755 = vpop.f32.mrb[0].mxu0
    %v1756 = vpop.f32.mrb[0].mxu0
    %v1757 = vpop.f32.mrb[0].mxu0
    %1758 = vdwg.mxu0
    %v1760 = vsel %vm1109, %v1570, 0
    %v1763 = vsel %vm1577, %v1049, 0
    %1765 = vmatprep.subr.bf16.mxu0 0
    %1766 = vmatpush1.bf16.msra.mxu0 %v1763
    %1767 = vmatprep.subr.bf16.mxu0 0
    %1768 = vmatpush1.bf16.msra.mxu0 0
    %1769 = vmatprep.subr.bf16.mxu0 0
    %1770 = vmatpush1.bf16.msra.mxu0 0
    %1771 = vmatprep.subr.bf16.mxu0 0
    %1772 = vmatpush1.bf16.msra.mxu0 0
    %1773 = vmatprep.subr.bf16.mxu0 0
    %1774 = vmatpush1.bf16.msra.mxu0 0
    %1775 = vmatprep.subr.bf16.mxu0 0
    %1776 = vmatpush1.bf16.msra.mxu0 0
    %1777 = vmatprep.subr.bf16.mxu0 0
    %1778 = vmatpush1.bf16.msra.mxu0 0
    %1779 = vmatprep.subr.bf16.mxu0 0
    %1780 = vmatpush1.bf16.msra.mxu0 0
    %1781 = vmatprep.subr.bf16.mxu0 0
    %1782 = vmatpush1.bf16.msra.mxu0 0
    %1783 = vmatprep.subr.bf16.mxu0 0
    %1784 = vmatpush1.bf16.msra.mxu0 0
    %1785 = vmatprep.subr.bf16.mxu0 0
    %1786 = vmatpush1.bf16.msra.mxu0 0
    %1787 = vmatprep.subr.bf16.mxu0 0
    %1788 = vmatpush1.bf16.msra.mxu0 0
    %1789 = vmatprep.subr.bf16.mxu0 0
    %1790 = vmatpush1.bf16.msra.mxu0 0
    %1791 = vmatprep.subr.bf16.mxu0 0
    %1792 = vmatpush1.bf16.msra.mxu0 0
    %1793 = vmatprep.subr.bf16.mxu0 0
    %1794 = vmatpush1.bf16.msra.mxu0 0
    %1795 = vmatprep.subr.bf16.mxu0 0
    %1796 = vmatpush1.bf16.msra.mxu0 0
    %1797 = vmatprep.mubr.bf16.mxu0 0
    %1798 = vmatmul.mubr.bf16.gmra.mrb[0].mxu0 %v1760
    %v1799 = vpop.f32.mrb[0].mxu0
    %v1800 = vadd.f32 0.0, %v1799
    %v1801 = vpop.f32.mrb[0].mxu0
    %v1802 = vpop.f32.mrb[0].mxu0
    %v1803 = vpop.f32.mrb[0].mxu0
    %1804 = vdwg.mxu0
    %v1806 = vsel %vm1109, %v1571, 0
    %v1809 = vsel %vm1577, %v1050, 0
    %1811 = vmatprep.subr.bf16.mxu0 0
    %1812 = vmatpush1.bf16.msra.mxu0 %v1809
    %1813 = vmatprep.subr.bf16.mxu0 0
    %1814 = vmatpush1.bf16.msra.mxu0 0
    %1815 = vmatprep.subr.bf16.mxu0 0
    %1816 = vmatpush1.bf16.msra.mxu0 0
    %1817 = vmatprep.subr.bf16.mxu0 0
    %1818 = vmatpush1.bf16.msra.mxu0 0
    %1819 = vmatprep.subr.bf16.mxu0 0
    %1820 = vmatpush1.bf16.msra.mxu0 0
    %1821 = vmatprep.subr.bf16.mxu0 0
    %1822 = vmatpush1.bf16.msra.mxu0 0
    %1823 = vmatprep.subr.bf16.mxu0 0
    %1824 = vmatpush1.bf16.msra.mxu0 0
    %1825 = vmatprep.subr.bf16.mxu0 0
    %1826 = vmatpush1.bf16.msra.mxu0 0
    %1827 = vmatprep.subr.bf16.mxu0 0
    %1828 = vmatpush1.bf16.msra.mxu0 0
    %1829 = vmatprep.subr.bf16.mxu0 0
    %1830 = vmatpush1.bf16.msra.mxu0 0
    %1831 = vmatprep.subr.bf16.mxu0 0
    %1832 = vmatpush1.bf16.msra.mxu0 0
    %1833 = vmatprep.subr.bf16.mxu0 0
    %1834 = vmatpush1.bf16.msra.mxu0 0
    %1835 = vmatprep.subr.bf16.mxu0 0
    %1836 = vmatpush1.bf16.msra.mxu0 0
    %1837 = vmatprep.subr.bf16.mxu0 0
    %1838 = vmatpush1.bf16.msra.mxu0 0
    %1839 = vmatprep.subr.bf16.mxu0 0
    %1840 = vmatpush1.bf16.msra.mxu0 0
    %1841 = vmatprep.subr.bf16.mxu0 0
    %1842 = vmatpush1.bf16.msra.mxu0 0
    %1843 = vmatprep.mubr.bf16.mxu0 0
    %1844 = vmatmul.mubr.bf16.gmra.mrb[0].mxu0 %v1806
    %v1845 = vpop.f32.mrb[0].mxu0
    %v1846 = vadd.f32 0.0, %v1845
    %v1847 = vpop.f32.mrb[0].mxu0
    %v1848 = vpop.f32.mrb[0].mxu0
    %v1849 = vpop.f32.mrb[0].mxu0
    %1850 = vdwg.mxu0
    %v1852 = vsel %vm1109, %v1572, 0
    %v1855 = vsel %vm1577, %v1051, 0
    %1857 = vmatprep.subr.bf16.mxu0 0
    %1858 = vmatpush1.bf16.msra.mxu0 %v1855
    %1859 = vmatprep.subr.bf16.mxu0 0
    %1860 = vmatpush1.bf16.msra.mxu0 0
    %1861 = vmatprep.subr.bf16.mxu0 0
    %1862 = vmatpush1.bf16.msra.mxu0 0
    %1863 = vmatprep.subr.bf16.mxu0 0
    %1864 = vmatpush1.bf16.msra.mxu0 0
    %1865 = vmatprep.subr.bf16.mxu0 0
    %1866 = vmatpush1.bf16.msra.mxu0 0
    %1867 = vmatprep.subr.bf16.mxu0 0
    %1868 = vmatpush1.bf16.msra.mxu0 0
    %1869 = vmatprep.subr.bf16.mxu0 0
    %1870 = vmatpush1.bf16.msra.mxu0 0
    %1871 = vmatprep.subr.bf16.mxu0 0
    %1872 = vmatpush1.bf16.msra.mxu0 0
    %1873 = vmatprep.subr.bf16.mxu0 0
    %1874 = vmatpush1.bf16.msra.mxu0 0
    %1875 = vmatprep.subr.bf16.mxu0 0
    %1876 = vmatpush1.bf16.msra.mxu0 0
    %1877 = vmatprep.subr.bf16.mxu0 0
    %1878 = vmatpush1.bf16.msra.mxu0 0
    %1879 = vmatprep.subr.bf16.mxu0 0
    %1880 = vmatpush1.bf16.msra.mxu0 0
    %1881 = vmatprep.subr.bf16.mxu0 0
    %1882 = vmatpush1.bf16.msra.mxu0 0
    %1883 = vmatprep.subr.bf16.mxu0 0
    %1884 = vmatpush1.bf16.msra.mxu0 0
    %1885 = vmatprep.subr.bf16.mxu0 0
    %1886 = vmatpush1.bf16.msra.mxu0 0
    %1887 = vmatprep.subr.bf16.mxu0 0
    %1888 = vmatpush1.bf16.msra.mxu0 0
    %1889 = vmatprep.mubr.bf16.mxu0 0
    %1890 = vmatmul.mubr.bf16.gmra.mrb[0].mxu0 %v1852
    %v1891 = vpop.f32.mrb[0].mxu0
    %v1892 = vadd.f32 0.0, %v1891
    %v1893 = vpop.f32.mrb[0].mxu0
    %v1894 = vpop.f32.mrb[0].mxu0
    %v1895 = vpop.f32.mrb[0].mxu0
    %1896 = vdwg.mxu0
    %v1898 = vsel %vm1109, %v1573, 0
    %v1901 = vsel %vm1577, %v1052, 0
    %1903 = vmatprep.subr.bf16.mxu0 0
    %1904 = vmatpush1.bf16.msra.mxu0 %v1901
    %1905 = vmatprep.subr.bf16.mxu0 0
    %1906 = vmatpush1.bf16.msra.mxu0 0
    %1907 = vmatprep.subr.bf16.mxu0 0
    %1908 = vmatpush1.bf16.msra.mxu0 0
    %1909 = vmatprep.subr.bf16.mxu0 0
    %1910 = vmatpush1.bf16.msra.mxu0 0
    %1911 = vmatprep.subr.bf16.mxu0 0
    %1912 = vmatpush1.bf16.msra.mxu0 0
    %1913 = vmatprep.subr.bf16.mxu0 0
    %1914 = vmatpush1.bf16.msra.mxu0 0
    %1915 = vmatprep.subr.bf16.mxu0 0
    %1916 = vmatpush1.bf16.msra.mxu0 0
    %1917 = vmatprep.subr.bf16.mxu0 0
    %1918 = vmatpush1.bf16.msra.mxu0 0
    %1919 = vmatprep.subr.bf16.mxu0 0
    %1920 = vmatpush1.bf16.msra.mxu0 0
    %1921 = vmatprep.subr.bf16.mxu0 0
    %1922 = vmatpush1.bf16.msra.mxu0 0
    %1923 = vmatprep.subr.bf16.mxu0 0
    %1924 = vmatpush1.bf16.msra.mxu0 0
    %1925 = vmatprep.subr.bf16.mxu0 0
    %1926 = vmatpush1.bf16.msra.mxu0 0
    %1927 = vmatprep.subr.bf16.mxu0 0
    %1928 = vmatpush1.bf16.msra.mxu0 0
    %1929 = vmatprep.subr.bf16.mxu0 0
    %1930 = vmatpush1.bf16.msra.mxu0 0
    %1931 = vmatprep.subr.bf16.mxu0 0
    %1932 = vmatpush1.bf16.msra.mxu0 0
    %1933 = vmatprep.subr.bf16.mxu0 0
    %1934 = vmatpush1.bf16.msra.mxu0 0
    %1935 = vmatprep.mubr.bf16.mxu0 0
    %1936 = vmatmul.mubr.bf16.gmra.mrb[0].mxu0 %v1898
    %v1937 = vpop.f32.mrb[0].mxu0
    %v1938 = vadd.f32 0.0, %v1937
    %v1939 = vpop.f32.mrb[0].mxu0
    %v1940 = vpop.f32.mrb[0].mxu0
    %v1941 = vpop.f32.mrb[0].mxu0
    %1942 = vdwg.mxu0
    %v1943 = vpack.c.bf16 %v1616, %v1616
    %v1944 = vpack.c.bf16 %v1662, %v1662
    %v1945 = vpack.c.bf16 %v1708, %v1708
    %v1946 = vpack.c.bf16 %v1754, %v1754
    %v1947 = vpack.c.bf16 %v1800, %v1800
    %v1948 = vpack.c.bf16 %v1846, %v1846
    %v1949 = vpack.c.bf16 %v1892, %v1892
    %v1950 = vpack.c.bf16 %v1938, %v1938
    %v1951 = vld [vmem:[#allocation8] sm:$0xf]
    %s1952 = scalar_lea.vmem [#allocation8], 4
    %v1953 = vld [vmem:[%s1952] sm:$0xf]
    %v1956 = vunpack.c.l.b16 %v1944
    %v1957 = vunpack.c.l.b16 %v1948
    %v1958 = vpack.c.b16 %v1957, %v1956
    %v1960 = vsel %vm1109, %v1958, 0
    %v1963 = vsel %vm1577, %v1953, 0
    %1965 = vmatprep.subr.bf16.mxu0 0
    %1966 = vmatpush1.bf16.msra.mxu0 %v1963
    %1967 = vmatprep.subr.bf16.mxu0 0
    %1968 = vmatpush1.bf16.msra.mxu0 0
    %1969 = vmatprep.subr.bf16.mxu0 0
    %1970 = vmatpush1.bf16.msra.mxu0 0
    %1971 = vmatprep.subr.bf16.mxu0 0
    %1972 = vmatpush1.bf16.msra.mxu0 0
    %1973 = vmatprep.subr.bf16.mxu0 0
    %1974 = vmatpush1.bf16.msra.mxu0 0
    %1975 = vmatprep.subr.bf16.mxu0 0
    %1976 = vmatpush1.bf16.msra.mxu0 0
    %1977 = vmatprep.subr.bf16.mxu0 0
    %1978 = vmatpush1.bf16.msra.mxu0 0
    %1979 = vmatprep.subr.bf16.mxu0 0
    %1980 = vmatpush1.bf16.msra.mxu0 0
    %1981 = vmatprep.subr.bf16.mxu0 0
    %1982 = vmatpush1.bf16.msra.mxu0 0
    %1983 = vmatprep.subr.bf16.mxu0 0
    %1984 = vmatpush1.bf16.msra.mxu0 0
    %1985 = vmatprep.subr.bf16.mxu0 0
    %1986 = vmatpush1.bf16.msra.mxu0 0
    %1987 = vmatprep.subr.bf16.mxu0 0
    %1988 = vmatpush1.bf16.msra.mxu0 0
    %1989 = vmatprep.subr.bf16.mxu0 0
    %1990 = vmatpush1.bf16.msra.mxu0 0
    %1991 = vmatprep.subr.bf16.mxu0 0
    %1992 = vmatpush1.bf16.msra.mxu0 0
    %1993 = vmatprep.subr.bf16.mxu0 0
    %1994 = vmatpush1.bf16.msra.mxu0 0
    %1995 = vmatprep.subr.bf16.mxu0 0
    %1996 = vmatpush1.bf16.msra.mxu0 0
    %1997 = vmatprep.mubr.bf16.mxu0 0
    %1998 = vmatmul.mubr.bf16.gmra.mrb[0].mxu0 %v1960
    %v1999 = vpop.f32.mrb[0].mxu0
    %v2000 = vadd.f32 0.0, %v1999
    %v2001 = vpop.f32.mrb[0].mxu0
    %v2002 = vpop.f32.mrb[0].mxu0
    %v2003 = vadd.f32 0.0, %v2002
    %v2004 = vpop.f32.mrb[0].mxu0
    %2005 = vdwg.mxu0
    %v2008 = vunpack.c.l.b16 %v1943
    %v2009 = vunpack.c.l.b16 %v1947
    %v2010 = vpack.c.b16 %v2009, %v2008
    %v2012 = vsel %vm1109, %v2010, 0
    %v2015 = vsel %vm1577, %v1951, 0
    %2017 = vmatprep.subr.bf16.mxu0 0
    %2018 = vmatpush1.bf16.msra.mxu0 %v2015
    %2019 = vmatprep.subr.bf16.mxu0 0
    %2020 = vmatpush1.bf16.msra.mxu0 0
    %2021 = vmatprep.subr.bf16.mxu0 0
    %2022 = vmatpush1.bf16.msra.mxu0 0
    %2023 = vmatprep.subr.bf16.mxu0 0
    %2024 = vmatpush1.bf16.msra.mxu0 0
    %2025 = vmatprep.subr.bf16.mxu0 0
    %2026 = vmatpush1.bf16.msra.mxu0 0
    %2027 = vmatprep.subr.bf16.mxu0 0
    %2028 = vmatpush1.bf16.msra.mxu0 0
    %2029 = vmatprep.subr.bf16.mxu0 0
    %2030 = vmatpush1.bf16.msra.mxu0 0
    %2031 = vmatprep.subr.bf16.mxu0 0
    %2032 = vmatpush1.bf16.msra.mxu0 0
    %2033 = vmatprep.subr.bf16.mxu0 0
    %2034 = vmatpush1.bf16.msra.mxu0 0
    %2035 = vmatprep.subr.bf16.mxu0 0
    %2036 = vmatpush1.bf16.msra.mxu0 0
    %2037 = vmatprep.subr.bf16.mxu0 0
    %2038 = vmatpush1.bf16.msra.mxu0 0
    %2039 = vmatprep.subr.bf16.mxu0 0
    %2040 = vmatpush1.bf16.msra.mxu0 0
    %2041 = vmatprep.subr.bf16.mxu0 0
    %2042 = vmatpush1.bf16.msra.mxu0 0
    %2043 = vmatprep.subr.bf16.mxu0 0
    %2044 = vmatpush1.bf16.msra.mxu0 0
    %2045 = vmatprep.subr.bf16.mxu0 0
    %2046 = vmatpush1.bf16.msra.mxu0 0
    %2047 = vmatprep.subr.bf16.mxu0 0
    %2048 = vmatpush1.bf16.msra.mxu0 0
    %2049 = vmatprep.mubr.bf16.mxu0 0
    %2050 = vmatmul.mubr.bf16.gmra.mrb[0].mxu0 %v2012
    %v2051 = vpop.f32.mrb[0].mxu0
    %v2052 = vadd.f32 %v2000, %v2051
    %v2053 = vpop.f32.mrb[0].mxu0
    %v2054 = vpop.f32.mrb[0].mxu0
    %v2055 = vadd.f32 %v2003, %v2054
    %v2056 = vpop.f32.mrb[0].mxu0
    %2057 = vdwg.mxu0
    %s2058 = scalar_lea.vmem [#allocation8], 8
    %v2059 = vld [vmem:[%s2058] sm:$0xf]
    %v2062 = vunpack.c.l.b16 %v1945
    %v2063 = vunpack.c.l.b16 %v1949
    %v2064 = vpack.c.b16 %v2063, %v2062
    %v2066 = vsel %vm1109, %v2064, 0
    %v2069 = vsel %vm1577, %v2059, 0
    %2071 = vmatprep.subr.bf16.mxu0 0
    %2072 = vmatpush1.bf16.msra.mxu0 %v2069
    %2073 = vmatprep.subr.bf16.mxu0 0
    %2074 = vmatpush1.bf16.msra.mxu0 0
    %2075 = vmatprep.subr.bf16.mxu0 0
    %2076 = vmatpush1.bf16.msra.mxu0 0
    %2077 = vmatprep.subr.bf16.mxu0 0
    %2078 = vmatpush1.bf16.msra.mxu0 0
    %2079 = vmatprep.subr.bf16.mxu0 0
    %2080 = vmatpush1.bf16.msra.mxu0 0
    %2081 = vmatprep.subr.bf16.mxu0 0
    %2082 = vmatpush1.bf16.msra.mxu0 0
    %2083 = vmatprep.subr.bf16.mxu0 0
    %2084 = vmatpush1.bf16.msra.mxu0 0
    %2085 = vmatprep.subr.bf16.mxu0 0
    %2086 = vmatpush1.bf16.msra.mxu0 0
    %2087 = vmatprep.subr.bf16.mxu0 0
    %2088 = vmatpush1.bf16.msra.mxu0 0
    %2089 = vmatprep.subr.bf16.mxu0 0
    %2090 = vmatpush1.bf16.msra.mxu0 0
    %2091 = vmatprep.subr.bf16.mxu0 0
    %2092 = vmatpush1.bf16.msra.mxu0 0
    %2093 = vmatprep.subr.bf16.mxu0 0
    %2094 = vmatpush1.bf16.msra.mxu0 0
    %2095 = vmatprep.subr.bf16.mxu0 0
    %2096 = vmatpush1.bf16.msra.mxu0 0
    %2097 = vmatprep.subr.bf16.mxu0 0
    %2098 = vmatpush1.bf16.msra.mxu0 0
    %2099 = vmatprep.subr.bf16.mxu0 0
    %2100 = vmatpush1.bf16.msra.mxu0 0
    %2101 = vmatprep.subr.bf16.mxu0 0
    %2102 = vmatpush1.bf16.msra.mxu0 0
    %2103 = vmatprep.mubr.bf16.mxu0 0
    %2104 = vmatmul.mubr.bf16.gmra.mrb[0].mxu0 %v2066
    %v2105 = vpop.f32.mrb[0].mxu0
    %v2106 = vadd.f32 0.0, %v2105
    %v2107 = vpop.f32.mrb[0].mxu0
    %v2108 = vpop.f32.mrb[0].mxu0
    %v2109 = vadd.f32 0.0, %v2108
    %v2110 = vpop.f32.mrb[0].mxu0
    %2111 = vdwg.mxu0
    %v2112 = vadd.f32 %v2052, %v2106
    %v2113 = vadd.f32 %v2055, %v2109
    %s2114 = scalar_lea.vmem [#allocation8], 12
    %v2115 = vld [vmem:[%s2114] sm:$0xf]
    %v2118 = vunpack.c.l.b16 %v1946
    %v2119 = vunpack.c.l.b16 %v1950
    %v2120 = vpack.c.b16 %v2119, %v2118
    %v2122 = vsel %vm1109, %v2120, 0
    %v2125 = vsel %vm1577, %v2115, 0
    %2127 = vmatprep.subr.bf16.mxu0 0
    %2128 = vmatpush1.bf16.msra.mxu0 %v2125
    %2129 = vmatprep.subr.bf16.mxu0 0
    %2130 = vmatpush1.bf16.msra.mxu0 0
    %2131 = vmatprep.subr.bf16.mxu0 0
    %2132 = vmatpush1.bf16.msra.mxu0 0
    %2133 = vmatprep.subr.bf16.mxu0 0
    %2134 = vmatpush1.bf16.msra.mxu0 0
    %2135 = vmatprep.subr.bf16.mxu0 0
    %2136 = vmatpush1.bf16.msra.mxu0 0
    %2137 = vmatprep.subr.bf16.mxu0 0
    %2138 = vmatpush1.bf16.msra.mxu0 0
    %2139 = vmatprep.subr.bf16.mxu0 0
    %2140 = vmatpush1.bf16.msra.mxu0 0
    %2141 = vmatprep.subr.bf16.mxu0 0
    %2142 = vmatpush1.bf16.msra.mxu0 0
    %2143 = vmatprep.subr.bf16.mxu0 0
    %2144 = vmatpush1.bf16.msra.mxu0 0
    %2145 = vmatprep.subr.bf16.mxu0 0
    %2146 = vmatpush1.bf16.msra.mxu0 0
    %2147 = vmatprep.subr.bf16.mxu0 0
    %2148 = vmatpush1.bf16.msra.mxu0 0
    %2149 = vmatprep.subr.bf16.mxu0 0
    %2150 = vmatpush1.bf16.msra.mxu0 0
    %2151 = vmatprep.subr.bf16.mxu0 0
    %2152 = vmatpush1.bf16.msra.mxu0 0
    %2153 = vmatprep.subr.bf16.mxu0 0
    %2154 = vmatpush1.bf16.msra.mxu0 0
    %2155 = vmatprep.subr.bf16.mxu0 0
    %2156 = vmatpush1.bf16.msra.mxu0 0
    %2157 = vmatprep.subr.bf16.mxu0 0
    %2158 = vmatpush1.bf16.msra.mxu0 0
    %2159 = vmatprep.mubr.bf16.mxu0 0
    %2160 = vmatmul.mubr.bf16.gmra.mrb[0].mxu0 %v2122
    %v2161 = vpop.f32.mrb[0].mxu0
    %v2162 = vadd.f32 0.0, %v2161
    %v2163 = vpop.f32.mrb[0].mxu0
    %v2164 = vpop.f32.mrb[0].mxu0
    %v2165 = vadd.f32 0.0, %v2164
    %v2166 = vpop.f32.mrb[0].mxu0
    %2167 = vdwg.mxu0
    %v2168 = vadd.f32 %v2112, %v2162
    %v2169 = vadd.f32 %v2113, %v2165
    %v2170 = vld [vmem:[%s4] sm:$0x1]
    %v2172 = vlaneseq
    %v2173 = vshrl.u32 %v2172, 7
    %v2174 = vsub.s32 0, %v2173
    %v2175 = vrot.slane %v2170, %v2174
    %v2177 = vadd.f32 %v2168, %v2175
    %v2178 = vadd.f32 %v2169, %v2175
    %v2182 = vunpack.c.l.s4 1983009808
    %v2183 = vunpack.c.0.s8 %v2182
    %v2184 = vlaneseq
    %v2185 = vshrl.u32 %v2184, 7
    %v2186 = vsub.s32 %v2183, %v2185
    %v2187 = vrot.slane %v2177, %v2186
    %v2189 = vunpack.c.l.s4 1983009808
    %v2190 = vunpack.c.0.s8 %v2189
    %v2191 = vlaneseq
    %v2192 = vshrl.u32 %v2191, 7
    %v2193 = vsub.s32 %v2190, %v2192
    %v2194 = vrot.slane %v2178, %v2193
    %vm2195 = vcmask 1044484
    %v2196 = vsel %vm2195, %v2187, %v2187
    %vm2197 = vcmask 1046534
    %v2198 = vsel %vm2197, %v2187, %v2196
    %v2199 = vrot.slane %v2194, 7
    %vm2200 = vcmask 1041409
    %v2201 = vsel %vm2200, %v2199, %v2198
    %vm2202 = vcmask 1043459
    %v2203 = vsel %vm2202, %v2199, %v2201
    %vm2204 = vcmask 1045509
    %v2205 = vsel %vm2204, %v2199, %v2203
    %vm2206 = vcmask 1047559
    %v2207 = vsel %vm2206, %v2199, %v2205
    %vm2209 = vcmask 254976
    %2210 = vst.msk [vmem:[#allocation10] sm:$0x3] %vm2209, %v2207
    %v2211 = vrot.slane %v2187, 1
    %v2212 = vsel %vm2195, %v2211, %v2211
    %v2213 = vsel %vm2197, %v2211, %v2212
    %v2214 = vsel %vm2200, %v2194, %v2213
    %v2215 = vsel %vm2202, %v2194, %v2214
    %v2216 = vsel %vm2204, %v2194, %v2215
    %v2217 = vsel %vm2206, %v2194, %v2216
    %2218 = vrot.lane.b32.xlu0 %v2217, 32
    %v2219 = vpop.permute.xlu0 %2218
    %vm2221 = vcmask 517376
    %2222 = vst.msk [vmem:[#allocation10] sm:$0x3] %vm2221, %v2219
    %v2223 = vcombine.high %v2187, %v2187
    %v2224 = vcombine.high %v2194, %v2194
    %v2225 = vsel %vm2195, %v2223, %v2223
    %v2226 = vsel %vm2197, %v2223, %v2225
    %v2227 = vrot.slane %v2224, 7
    %v2228 = vsel %vm2200, %v2227, %v2226
    %v2229 = vsel %vm2202, %v2227, %v2228
    %v2230 = vsel %vm2204, %v2227, %v2229
    %v2231 = vsel %vm2206, %v2227, %v2230
    %2232 = vrot.lane.b32.xlu0 %v2231, 64
    %v2233 = vpop.permute.xlu0 %2232
    %vm2235 = vcmask 779776
    %2236 = vst.msk [vmem:[#allocation10] sm:$0x3] %vm2235, %v2233
    %v2237 = vrot.slane %v2223, 1
    %v2238 = vsel %vm2195, %v2237, %v2237
    %v2239 = vsel %vm2197, %v2237, %v2238
    %v2240 = vsel %vm2200, %v2224, %v2239
    %v2241 = vsel %vm2202, %v2224, %v2240
    %v2242 = vsel %vm2204, %v2224, %v2241
    %v2243 = vsel %vm2206, %v2224, %v2242
    %2244 = vrot.lane.b32.xlu0 %v2243, 96
    %v2245 = vpop.permute.xlu0 %2244
    %vm2247 = vcmask 1042176
    %2248 = vst.msk [vmem:[#allocation10] sm:$0x3] %vm2247, %v2245
    %v2249 = vcombine.high %v2177, %v2177
    %v2251 = vunpack.c.l.s4 1983009808
    %v2252 = vunpack.c.0.s8 %v2251
    %v2253 = vlaneseq
    %v2254 = vshrl.u32 %v2253, 7
    %v2255 = vsub.s32 %v2252, %v2254
    %v2256 = vrot.slane %v2249, %v2255
    %v2257 = vcombine.high %v2178, %v2178
    %v2259 = vunpack.c.l.s4 1983009808
    %v2260 = vunpack.c.0.s8 %v2259
    %v2261 = vlaneseq
    %v2262 = vshrl.u32 %v2261, 7
    %v2263 = vsub.s32 %v2260, %v2262
    %v2264 = vrot.slane %v2257, %v2263
    %v2265 = vsel %vm2195, %v2256, %v2256
    %v2266 = vsel %vm2197, %v2256, %v2265
    %v2267 = vrot.slane %v2264, 7
    %v2268 = vsel %vm2200, %v2267, %v2266
    %v2269 = vsel %vm2202, %v2267, %v2268
    %v2270 = vsel %vm2204, %v2267, %v2269
    %v2271 = vsel %vm2206, %v2267, %v2270
    %2273 = vst.msk [vmem:[#allocation10 + $0x2] sm:$0x3] %vm2209, %v2271
    %v2274 = vrot.slane %v2256, 1
    %v2275 = vsel %vm2195, %v2274, %v2274
    %v2276 = vsel %vm2197, %v2274, %v2275
    %v2277 = vsel %vm2200, %v2264, %v2276
    %v2278 = vsel %vm2202, %v2264, %v2277
    %v2279 = vsel %vm2204, %v2264, %v2278
    %v2280 = vsel %vm2206, %v2264, %v2279
    %2281 = vrot.lane.b32.xlu0 %v2280, 32
    %v2282 = vpop.permute.xlu0 %2281
    %2284 = vst.msk [vmem:[#allocation10 + $0x2] sm:$0x3] %vm2221, %v2282
    %v2285 = vcombine.high %v2256, %v2256
    %v2286 = vcombine.high %v2264, %v2264
    %v2287 = vsel %vm2195, %v2285, %v2285
    %v2288 = vsel %vm2197, %v2285, %v2287
    %v2289 = vrot.slane %v2286, 7
    %v2290 = vsel %vm2200, %v2289, %v2288
    %v2291 = vsel %vm2202, %v2289, %v2290
    %v2292 = vsel %vm2204, %v2289, %v2291
    %v2293 = vsel %vm2206, %v2289, %v2292
    %2294 = vrot.lane.b32.xlu0 %v2293, 64
    %v2295 = vpop.permute.xlu0 %2294
    %2297 = vst.msk [vmem:[#allocation10 + $0x2] sm:$0x3] %vm2235, %v2295
    %v2298 = vrot.slane %v2285, 1
    %v2299 = vsel %vm2195, %v2298, %v2298
    %v2300 = vsel %vm2197, %v2298, %v2299
    %v2301 = vsel %vm2200, %v2286, %v2300
    %v2302 = vsel %vm2202, %v2286, %v2301
    %v2303 = vsel %vm2204, %v2286, %v2302
    %v2304 = vsel %vm2206, %v2286, %v2303
    %2305 = vrot.lane.b32.xlu0 %v2304, 96
    %v2306 = vpop.permute.xlu0 %2305
    %2308 = vst.msk [vmem:[#allocation10 + $0x2] sm:$0x3] %vm2247, %v2306
    // Predicated region
    $region38: #{tpu_custom_call.1} parent=1 // pred_check
      _
    $region39: #{tpu_custom_call.1} parent=1 // pred_check_branch
      %2310 = sbr.rel (0) target = $region41
    $region40: #{tpu_custom_call.1} parent=1 // pred_region
      %s2312 = ssub.s32 64, 64
      %2313 = vsyncadd [#allocation4], %s2312
      %s2315 = sshll.u32 [#allocation10], 4
      %s2316 = int_to_ptr.vmem [resolvable:$true] %s2315
      %2318 = dma.vmem_to_hbm [thread:$0]  %s2316, 64, %s5, [#allocation4]
    $region41: #{tpu_custom_call.1} parent=1 // pred_fallthru
      _
    // Predicated region
    $region42: #{tpu_custom_call.1} parent=1 // pred_check
      _
    $region43: #{tpu_custom_call.1} parent=1 // pred_check_branch
      %2320 = sbr.rel (0) target = $region45
    $region44: #{tpu_custom_call.1} parent=1 // pred_region
      %2321 = dma.done [#allocation4], 64
    $region45: #{tpu_custom_call.1} parent=1 // pred_fallthru
      _
    %2322 = vsyncpa [#allocation3], 1
    %2323 = vsyncpa [#allocation6], 1
    %2324 = vsyncpa [#allocation9], 1
    %2325 = vsyncpa [#allocation4], 1

</llo_original>
